<compile_context>
chip_gen: v6e
topology: v6e:2x2x1
jax: 0.10.0
libtpu: 0.0.40
codegen_flags: <defaults>
</compile_context>

<pallas_src>
import jax
import jax.numpy as jnp
from jax.experimental import pallas as pl
from jax.experimental.pallas import tpu as pltpu


def mul_conv1x1_kernel(s_ref, w_ref, x_ref, o_ref):
    # Fold the per-channel scale into the (small) weight tile:
    # (TCO, Cin) * (1, Cin)  -- ~20 cycles of VALU, hidden under DMA/MXU.
    w_scaled = w_ref[...] * s_ref[...]
    # 1x1 conv == plain matmul over channels on the MXU:
    # (TCO, Cin) @ (Cin, HW) -> (TCO, HW), f32 accumulation.
    o_ref[...] = jnp.dot(
        w_scaled, x_ref[...], preferred_element_type=jnp.float32
    ).astype(o_ref.dtype)


def _tensorcores_per_chip():
    """v7x has 2 TensorCores per chip; v5e/v6e have 1. Fallback: 1."""
    try:
        kind = jax.devices()[0].device_kind.lower()
        if "v7" in kind:
            return 2
    except Exception:
        pass
    return 1


def mul_conv1x1(x_nchw, scale_nc11, weight_oi11, *, cout_block=None):
    """x_nchw: (N, Cin, H, W), scale_nc11: (N, Cin, 1, 1), weight: (Cout, Cin, 1, 1)."""
    N, Cin, H, W = x_nchw.shape
    Cout = weight_oi11.shape[0]
    # TODO(synk): generalize to N > 1 (would need per-image scale handling).
    assert N == 1, "module is defined for batch size 1"

    if cout_block is None:
        # One Cout block per TensorCore: 2-way split on v7x, single step on
        # v5e/v6e (single-TC chips gain nothing from splitting, only per-step
        # overhead).
        n_cores = _tensorcores_per_chip()
        if n_cores > 1 and Cout % (8 * n_cores) == 0:
            cout_block = Cout // n_cores
        else:
            cout_block = Cout
    assert Cout % cout_block == 0 and cout_block % 8 == 0

    HW = H * W
    # Channels-first: all of these are pure reshapes (no transpose HLOs).
    x2d = x_nchw.reshape(Cin, HW)                 # (Cin, HW)
    s2d = scale_nc11.reshape(1, Cin)              # (1, Cin)
    w2d = weight_oi11.reshape(Cout, Cin)          # (Cout, Cin)

    n_blocks = Cout // cout_block
    dtype_bytes = jnp.dtype(x_nchw.dtype).itemsize
    # Each Cout block re-fetches the full (Cin, HW) activation tile (constant
    # index_map), so x's HBM traffic scales with n_blocks.
    cost = pl.CostEstimate(
        flops=2 * HW * Cin * Cout,
        transcendentals=0,
        bytes_accessed=(n_blocks * Cin * HW + Cout * Cin + Cout * HW + Cin)
        * dtype_bytes,
    )

    out2d = pl.pallas_call(
        mul_conv1x1_kernel,
        out_shape=jax.ShapeDtypeStruct((Cout, HW), x_nchw.dtype),
        grid_spec=pltpu.PrefetchScalarGridSpec(
            num_scalar_prefetch=0,
            grid=(n_blocks,),
            in_specs=[
                # per-channel scale: tiny, same block every step
                pl.BlockSpec((1, Cin), lambda i: (0, 0)),
                # weight: split along Cout (the output row dim)
                pl.BlockSpec((cout_block, Cin), lambda i: (i, 0)),
                # activations: full (Cin, HW) block, constant index
                pl.BlockSpec((Cin, HW), lambda i: (0, 0)),
            ],
            out_specs=pl.BlockSpec((cout_block, HW), lambda i: (i, 0)),
        ),
        compiler_params=pltpu.CompilerParams(
            dimension_semantics=("parallel",)),
        cost_estimate=cost,
    )(s2d, w2d, x2d)

    # (Cout, HW) -> (1, Cout, H, W): pure reshape, matches the PyTorch output.
    return out2d.reshape(N, Cout, H, W)


if __name__ == "__main__":
    key = jax.random.PRNGKey(0)
    k1, k2, k3 = jax.random.split(key, 3)

    # Shapes from the module: x297 (1,960,14,14), x302 (1,960,1,1),
    # Conv2d(960, 160, kernel_size=1, bias=False).
    N, Cin, H, W, Cout = 1, 960, 14, 14, 160
    x297 = jax.random.normal(k1, (N, Cin, H, W), dtype=jnp.float32)
    x302 = jax.random.normal(k2, (N, Cin, 1, 1), dtype=jnp.float32)
    weight = jax.random.normal(k3, (Cout, Cin, 1, 1), dtype=jnp.float32) * 0.02

    out = jax.block_until_ready(mul_conv1x1(x297, x302, weight))
    assert out.shape == (N, Cout, H, W)

    # pure-JAX reference for sanity
    ref = jnp.einsum("nchw,oc->nohw", x297 * x302, weight.reshape(Cout, Cin))
    assert jnp.allclose(out, ref, atol=1e-3, rtol=1e-3)

    print("KERNEL_OK")
</pallas_src>

<mosaic_0001>
module attributes {stable_mosaic.version = 11 : i64} {
  func.func @mul_conv1x1_kernel(%arg0: i32, %arg1: memref<1x960xf32, #tpu.memory_space<vmem>>, %arg2: memref<160x960xf32, #tpu.memory_space<vmem>>, %arg3: memref<960x196xf32, #tpu.memory_space<vmem>>, %arg4: memref<160x196xf32, #tpu.memory_space<vmem>>) attributes {dimension_semantics = [#tpu.dimension_semantics<parallel>], iteration_bounds = array<i64: 1>, scalar_prefetch = 0 : i64, scratch_operands = 0 : i64, tpu.core_type = #tpu.core_type<tc>, window_params = [{pipeline_mode = #tpu.pipeline_mode<synchronous>, transform_indices = @transform_0, window_bounds = array<i64: 1, 960>}, {transform_indices = @transform_1, window_bounds = array<i64: 160, 960>}, {pipeline_mode = #tpu.pipeline_mode<synchronous>, transform_indices = @transform_2, window_bounds = array<i64: 960, 196>}, {transform_indices = @transform_3, window_bounds = array<i64: 160, 196>}]} {
    %c0 = arith.constant 0 : index
    %c0_0 = arith.constant 0 : index
    %0 = vector.load %arg2[%c0, %c0_0] : memref<160x960xf32, #tpu.memory_space<vmem>>, vector<160x960xf32>
    %c0_1 = arith.constant 0 : index
    %c0_2 = arith.constant 0 : index
    %1 = vector.load %arg1[%c0_1, %c0_2] : memref<1x960xf32, #tpu.memory_space<vmem>>, vector<1x960xf32>
    %2 = vector.broadcast %1 : vector<1x960xf32> to vector<160x960xf32>
    %3 = arith.mulf %0, %2 : vector<160x960xf32>
    %c0_3 = arith.constant 0 : index
    %c0_4 = arith.constant 0 : index
    %4 = vector.load %arg3[%c0_3, %c0_4] : memref<960x196xf32, #tpu.memory_space<vmem>>, vector<960x196xf32>
    %cst = arith.constant dense<0.000000e+00> : vector<160x196xf32>
    %5 = tpu.matmul %3, %4, %cst {dimension_numbers = #tpu.dot_dimension_numbers<[1], [0], [0], [1], [0, 0, 1, 1], [], []>} : vector<160x960xf32>, vector<960x196xf32>, vector<160x196xf32> -> vector<160x196xf32>
    %c0_5 = arith.constant 0 : index
    %c0_6 = arith.constant 0 : index
    %6 = vector.load %arg4[%c0_5, %c0_6] : memref<160x196xf32, #tpu.memory_space<vmem>>, vector<160x196xf32>
    tpu.vector_store %arg4[%c0_5, %c0_6], %5 {strides = array<i32>} : memref<160x196xf32, #tpu.memory_space<vmem>>, vector<160x196xf32>,
    return
  }
  func.func @transform_0(%arg0: i32) -> (i32, i32) {
    %c0_i32 = arith.constant 0 : i32
    %c0_i32_0 = arith.constant 0 : i32
    %c0_i32_1 = arith.constant 0 : i32
    return %c0_i32, %c0_i32_0 : i32, i32
  }
  func.func @transform_1(%arg0: i32) -> (i32, i32) {
    %c0_i32 = arith.constant 0 : i32
    %c0_i32_0 = arith.constant 0 : i32
    return %arg0, %c0_i32 : i32, i32
  }
  func.func @transform_2(%arg0: i32) -> (i32, i32) {
    %c0_i32 = arith.constant 0 : i32
    %c0_i32_0 = arith.constant 0 : i32
    %c0_i32_1 = arith.constant 0 : i32
    return %c0_i32, %c0_i32_0 : i32, i32
  }
  func.func @transform_3(%arg0: i32) -> (i32, i32) {
    %c0_i32 = arith.constant 0 : i32
    %c0_i32_0 = arith.constant 0 : i32
    return %arg0, %c0_i32 : i32, i32
  }
}

</mosaic_0001>

<llo_original>
// kernel: tpu_custom_call.1
$region0: #{tpu_custom_call.1}
  #allocation0 [shape = 'u32[]', space=smem, size = 0x4, offset = 0x4, fixed_abs, tag = 'smem constant byte address 0x4 - core index']
  #allocation1 [shape = 'u32[144,128]{1,0:T(1,128)}', space=vmem, size = 0x12000, scoped, tag = 'internal scratch']
  %s0 = inlined_call_operand.vmem [shape: f32[1,960], index: 0, kind: input, shape index: {}]
  %s1 = inlined_call_operand.vmem [shape: f32[160,960], index: 1, kind: input, shape index: {}]
  %s2 = inlined_call_operand.vmem [shape: f32[960,196], index: 2, kind: input, shape index: {}]
  %s3 = inlined_call_operand.hbm [shape: f32[160,196], index: 3, kind: output, shape index: {}]
  %s4 = sld [smem:[#allocation0]]
  $region22: #{tpu_custom_call.1} parent=0
    _
  %s6 = ssub.s32 1, %s4
  %s7 = scalar_select 0, %s6, %s4
  $region1: #{tpu_custom_call.1} parent=0
    #allocation2 [shape = 'u8[163840]{0}', space=vmem, size = 0x28000, scoped, tag = 'output window, operand 0, single buffered']
    #allocation3 [shape = 's32[1]{0}', space=sflag, size = 0x4, scoped, tag = 'scoped memory for tpu_custom_call.1']
    %8 = vsyncpa [#allocation3], 0
    // Predicated region
    $region2: #{tpu_custom_call.1} parent=1 // pred_check
      _
    $region3: #{tpu_custom_call.1} parent=1 // pred_check_branch
      %10 = sbr.rel (0) target = $region5
    $region4: #{tpu_custom_call.1} parent=1 // pred_region
      _
    $region5: #{tpu_custom_call.1} parent=1 // pred_fallthru
      _
    // Predicated region
    $region6: #{tpu_custom_call.1} parent=1 // pred_check
      _
    $region7: #{tpu_custom_call.1} parent=1 // pred_check_branch
      %12 = sbr.rel (0) target = $region9
    $region8: #{tpu_custom_call.1} parent=1 // pred_region
      _
    $region9: #{tpu_custom_call.1} parent=1 // pred_fallthru
      _
    // Predicated region
    $region10: #{tpu_custom_call.1} parent=1 // pred_check
      _
    $region11: #{tpu_custom_call.1} parent=1 // pred_check_branch
      %14 = sbr.rel (0) target = $region13
    $region12: #{tpu_custom_call.1} parent=1 // pred_region
      _
    $region13: #{tpu_custom_call.1} parent=1 // pred_fallthru
      _
    %v15 = vld [vmem:[%s1] sm:$0xff]
    %v16 = vld [vmem:[%s1 + $0x8] sm:$0xff]
    %v17 = vld [vmem:[%s1 + $0x10] sm:$0xff]
    %v18 = vld [vmem:[%s1 + $0x18] sm:$0xff]
    %v19 = vld [vmem:[%s1 + $0x20] sm:$0xff]
    %v20 = vld [vmem:[%s1 + $0x28] sm:$0xff]
    %v21 = vld [vmem:[%s1 + $0x30] sm:$0xff]
    %v22 = vld [vmem:[%s1 + $0x38] sm:$0xff]
    %v23 = vld [vmem:[%s1 + $0x40] sm:$0xff]
    %v24 = vld [vmem:[%s1 + $0x48] sm:$0xff]
    %v25 = vld [vmem:[%s1 + $0x50] sm:$0xff]
    %v26 = vld [vmem:[%s1 + $0x58] sm:$0xff]
    %v27 = vld [vmem:[%s1 + $0x60] sm:$0xff]
    %v28 = vld [vmem:[%s1 + $0x68] sm:$0xff]
    %v29 = vld [vmem:[%s1 + $0x70] sm:$0xff]
    %v30 = vld [vmem:[%s1 + $0x78] sm:$0xff]
    %v31 = vld [vmem:[%s1 + $0x80] sm:$0xff]
    %v32 = vld [vmem:[%s1 + $0x88] sm:$0xff]
    %v33 = vld [vmem:[%s1 + $0x90] sm:$0xff]
    %v34 = vld [vmem:[%s1 + $0x98] sm:$0xff]
    %v35 = vld [vmem:[%s1 + $0xa0] sm:$0xff]
    %v36 = vld [vmem:[%s1 + $0xa8] sm:$0xff]
    %v37 = vld [vmem:[%s1 + $0xb0] sm:$0xff]
    %v38 = vld [vmem:[%s1 + $0xb8] sm:$0xff]
    %v39 = vld [vmem:[%s1 + $0xc0] sm:$0xff]
    %v40 = vld [vmem:[%s1 + $0xc8] sm:$0xff]
    %v41 = vld [vmem:[%s1 + $0xd0] sm:$0xff]
    %v42 = vld [vmem:[%s1 + $0xd8] sm:$0xff]
    %v43 = vld [vmem:[%s1 + $0xe0] sm:$0xff]
    %v44 = vld [vmem:[%s1 + $0xe8] sm:$0xff]
    %v45 = vld [vmem:[%s1 + $0xf0] sm:$0xff]
    %v46 = vld [vmem:[%s1 + $0xf8] sm:$0xff]
    %v47 = vld [vmem:[%s1 + $0x100] sm:$0xff]
    %v48 = vld [vmem:[%s1 + $0x108] sm:$0xff]
    %v49 = vld [vmem:[%s1 + $0x110] sm:$0xff]
    %v50 = vld [vmem:[%s1 + $0x118] sm:$0xff]
    %v51 = vld [vmem:[%s1 + $0x120] sm:$0xff]
    %v52 = vld [vmem:[%s1 + $0x128] sm:$0xff]
    %v53 = vld [vmem:[%s1 + $0x130] sm:$0xff]
    %v54 = vld [vmem:[%s1 + $0x138] sm:$0xff]
    %v55 = vld [vmem:[%s1 + $0x140] sm:$0xff]
    %v56 = vld [vmem:[%s1 + $0x148] sm:$0xff]
    %v57 = vld [vmem:[%s1 + $0x150] sm:$0xff]
    %v58 = vld [vmem:[%s1 + $0x158] sm:$0xff]
    %v59 = vld [vmem:[%s1 + $0x160] sm:$0xff]
    %v60 = vld [vmem:[%s1 + $0x168] sm:$0xff]
    %v61 = vld [vmem:[%s1 + $0x170] sm:$0xff]
    %v62 = vld [vmem:[%s1 + $0x178] sm:$0xff]
    %v63 = vld [vmem:[%s1 + $0x180] sm:$0xff]
    %v64 = vld [vmem:[%s1 + $0x188] sm:$0xff]
    %v65 = vld [vmem:[%s1 + $0x190] sm:$0xff]
    %v66 = vld [vmem:[%s1 + $0x198] sm:$0xff]
    %v67 = vld [vmem:[%s1 + $0x1a0] sm:$0xff]
    %v68 = vld [vmem:[%s1 + $0x1a8] sm:$0xff]
    %v69 = vld [vmem:[%s1 + $0x1b0] sm:$0xff]
    %v70 = vld [vmem:[%s1 + $0x1b8] sm:$0xff]
    %v71 = vld [vmem:[%s1 + $0x1c0] sm:$0xff]
    %v72 = vld [vmem:[%s1 + $0x1c8] sm:$0xff]
    %v73 = vld [vmem:[%s1 + $0x1d0] sm:$0xff]
    %v74 = vld [vmem:[%s1 + $0x1d8] sm:$0xff]
    %v75 = vld [vmem:[%s1 + $0x1e0] sm:$0xff]
    %v76 = vld [vmem:[%s1 + $0x1e8] sm:$0xff]
    %v77 = vld [vmem:[%s1 + $0x1f0] sm:$0xff]
    %v78 = vld [vmem:[%s1 + $0x1f8] sm:$0xff]
    %v79 = vld [vmem:[%s1 + $0x200] sm:$0xff]
    %v80 = vld [vmem:[%s1 + $0x208] sm:$0xff]
    %v81 = vld [vmem:[%s1 + $0x210] sm:$0xff]
    %v82 = vld [vmem:[%s1 + $0x218] sm:$0xff]
    %v83 = vld [vmem:[%s1 + $0x220] sm:$0xff]
    %v84 = vld [vmem:[%s1 + $0x228] sm:$0xff]
    %v85 = vld [vmem:[%s1 + $0x230] sm:$0xff]
    %v86 = vld [vmem:[%s1 + $0x238] sm:$0xff]
    %v87 = vld [vmem:[%s1 + $0x240] sm:$0xff]
    %v88 = vld [vmem:[%s1 + $0x248] sm:$0xff]
    %v89 = vld [vmem:[%s1 + $0x250] sm:$0xff]
    %v90 = vld [vmem:[%s1 + $0x258] sm:$0xff]
    %v91 = vld [vmem:[%s1 + $0x260] sm:$0xff]
    %v92 = vld [vmem:[%s1 + $0x268] sm:$0xff]
    %v93 = vld [vmem:[%s1 + $0x270] sm:$0xff]
    %v94 = vld [vmem:[%s1 + $0x278] sm:$0xff]
    %v95 = vld [vmem:[%s1 + $0x280] sm:$0xff]
    %v96 = vld [vmem:[%s1 + $0x288] sm:$0xff]
    %v97 = vld [vmem:[%s1 + $0x290] sm:$0xff]
    %v98 = vld [vmem:[%s1 + $0x298] sm:$0xff]
    %v99 = vld [vmem:[%s1 + $0x2a0] sm:$0xff]
    %v100 = vld [vmem:[%s1 + $0x2a8] sm:$0xff]
    %v101 = vld [vmem:[%s1 + $0x2b0] sm:$0xff]
    %v102 = vld [vmem:[%s1 + $0x2b8] sm:$0xff]
    %v103 = vld [vmem:[%s1 + $0x2c0] sm:$0xff]
    %v104 = vld [vmem:[%s1 + $0x2c8] sm:$0xff]
    %v105 = vld [vmem:[%s1 + $0x2d0] sm:$0xff]
    %v106 = vld [vmem:[%s1 + $0x2d8] sm:$0xff]
    %v107 = vld [vmem:[%s1 + $0x2e0] sm:$0xff]
    %v108 = vld [vmem:[%s1 + $0x2e8] sm:$0xff]
    %v109 = vld [vmem:[%s1 + $0x2f0] sm:$0xff]
    %v110 = vld [vmem:[%s1 + $0x2f8] sm:$0xff]
    %v111 = vld [vmem:[%s1 + $0x300] sm:$0xff]
    %v112 = vld [vmem:[%s1 + $0x308] sm:$0xff]
    %v113 = vld [vmem:[%s1 + $0x310] sm:$0xff]
    %v114 = vld [vmem:[%s1 + $0x318] sm:$0xff]
    %v115 = vld [vmem:[%s1 + $0x320] sm:$0xff]
    %v116 = vld [vmem:[%s1 + $0x328] sm:$0xff]
    %v117 = vld [vmem:[%s1 + $0x330] sm:$0xff]
    %v118 = vld [vmem:[%s1 + $0x338] sm:$0xff]
    %v119 = vld [vmem:[%s1 + $0x340] sm:$0xff]
    %v120 = vld [vmem:[%s1 + $0x348] sm:$0xff]
    %v121 = vld [vmem:[%s1 + $0x350] sm:$0xff]
    %v122 = vld [vmem:[%s1 + $0x358] sm:$0xff]
    %v123 = vld [vmem:[%s1 + $0x360] sm:$0xff]
    %v124 = vld [vmem:[%s1 + $0x368] sm:$0xff]
    %v125 = vld [vmem:[%s1 + $0x370] sm:$0xff]
    %v126 = vld [vmem:[%s1 + $0x378] sm:$0xff]
    %v127 = vld [vmem:[%s1 + $0x380] sm:$0xff]
    %v128 = vld [vmem:[%s1 + $0x388] sm:$0xff]
    %v129 = vld [vmem:[%s1 + $0x390] sm:$0xff]
    %v130 = vld [vmem:[%s1 + $0x398] sm:$0xff]
    %v131 = vld [vmem:[%s1 + $0x3a0] sm:$0xff]
    %v132 = vld [vmem:[%s1 + $0x3a8] sm:$0xff]
    %v133 = vld [vmem:[%s1 + $0x3b0] sm:$0xff]
    %v134 = vld [vmem:[%s1 + $0x3b8] sm:$0xff]
    %v135 = vld [vmem:[%s1 + $0x3c0] sm:$0xff]
    %v136 = vld [vmem:[%s1 + $0x3c8] sm:$0xff]
    %v137 = vld [vmem:[%s1 + $0x3d0] sm:$0xff]
    %v138 = vld [vmem:[%s1 + $0x3d8] sm:$0xff]
    %v139 = vld [vmem:[%s1 + $0x3e0] sm:$0xff]
    %v140 = vld [vmem:[%s1 + $0x3e8] sm:$0xff]
    %v141 = vld [vmem:[%s1 + $0x3f0] sm:$0xff]
    %v142 = vld [vmem:[%s1 + $0x3f8] sm:$0xff]
    %v143 = vld [vmem:[%s1 + $0x400] sm:$0xff]
    %v144 = vld [vmem:[%s1 + $0x408] sm:$0xff]
    %v145 = vld [vmem:[%s1 + $0x410] sm:$0xff]
    %v146 = vld [vmem:[%s1 + $0x418] sm:$0xff]
    %v147 = vld [vmem:[%s1 + $0x420] sm:$0xff]
    %v148 = vld [vmem:[%s1 + $0x428] sm:$0xff]
    %v149 = vld [vmem:[%s1 + $0x430] sm:$0xff]
    %v150 = vld [vmem:[%s1 + $0x438] sm:$0xff]
    %v151 = vld [vmem:[%s1 + $0x440] sm:$0xff]
    %v152 = vld [vmem:[%s1 + $0x448] sm:$0xff]
    %v153 = vld [vmem:[%s1 + $0x450] sm:$0xff]
    %v154 = vld [vmem:[%s1 + $0x458] sm:$0xff]
    %v155 = vld [vmem:[%s1 + $0x460] sm:$0xff]
    %v156 = vld [vmem:[%s1 + $0x468] sm:$0xff]
    %v157 = vld [vmem:[%s1 + $0x470] sm:$0xff]
    %v158 = vld [vmem:[%s1 + $0x478] sm:$0xff]
    %v159 = vld [vmem:[%s1 + $0x480] sm:$0xff]
    %v160 = vld [vmem:[%s1 + $0x488] sm:$0xff]
    %v161 = vld [vmem:[%s1 + $0x490] sm:$0xff]
    %v162 = vld [vmem:[%s1 + $0x498] sm:$0xff]
    %v163 = vld [vmem:[%s1 + $0x4a0] sm:$0xff]
    %v164 = vld [vmem:[%s1 + $0x4a8] sm:$0xff]
    %v165 = vld [vmem:[%s1 + $0x4b0] sm:$0xff]
    %v166 = vld [vmem:[%s1 + $0x4b8] sm:$0xff]
    %v167 = vld [vmem:[%s1 + $0x4c0] sm:$0xff]
    %v168 = vld [vmem:[%s1 + $0x4c8] sm:$0xff]
    %v169 = vld [vmem:[%s1 + $0x4d0] sm:$0xff]
    %v170 = vld [vmem:[%s1 + $0x4d8] sm:$0xff]
    %v171 = vld [vmem:[%s1 + $0x4e0] sm:$0xff]
    %v172 = vld [vmem:[%s1 + $0x4e8] sm:$0xff]
    %v173 = vld [vmem:[%s1 + $0x4f0] sm:$0xff]
    %v174 = vld [vmem:[%s1 + $0x4f8] sm:$0xff]
    %v175 = vld [vmem:[%s0] sm:$0xff]
    %v177 = vlaneseq
    %v178 = vshrl.u32 %v177, 7
    %v179 = vsub.s32 0, %v178
    %v180 = vrot.slane %v175, %v179
    %v181 = vlaneseq
    %v182 = vshrl.u32 %v181, 7
    %v183 = vsub.s32 1, %v182
    %v184 = vrot.slane %v175, %v183
    %v185 = vlaneseq
    %v186 = vshrl.u32 %v185, 7
    %v187 = vsub.s32 2, %v186
    %v188 = vrot.slane %v175, %v187
    %v189 = vlaneseq
    %v190 = vshrl.u32 %v189, 7
    %v191 = vsub.s32 3, %v190
    %v192 = vrot.slane %v175, %v191
    %v193 = vlaneseq
    %v194 = vshrl.u32 %v193, 7
    %v195 = vsub.s32 4, %v194
    %v196 = vrot.slane %v175, %v195
    %v197 = vlaneseq
    %v198 = vshrl.u32 %v197, 7
    %v199 = vsub.s32 5, %v198
    %v200 = vrot.slane %v175, %v199
    %v201 = vlaneseq
    %v202 = vshrl.u32 %v201, 7
    %v203 = vsub.s32 6, %v202
    %v204 = vrot.slane %v175, %v203
    %v205 = vlaneseq
    %v206 = vshrl.u32 %v205, 7
    %v207 = vsub.s32 7, %v206
    %v208 = vrot.slane %v175, %v207
    %v217 = vmul.f32 %v15, %v180
    %v218 = vmul.f32 %v16, %v184
    %v219 = vmul.f32 %v17, %v188
    %v220 = vmul.f32 %v18, %v192
    %v221 = vmul.f32 %v19, %v196
    %v222 = vmul.f32 %v20, %v200
    %v223 = vmul.f32 %v21, %v204
    %v224 = vmul.f32 %v22, %v208
    %v225 = vmul.f32 %v23, %v180
    %v226 = vmul.f32 %v24, %v184
    %v227 = vmul.f32 %v25, %v188
    %v228 = vmul.f32 %v26, %v192
    %v229 = vmul.f32 %v27, %v196
    %v230 = vmul.f32 %v28, %v200
    %v231 = vmul.f32 %v29, %v204
    %v232 = vmul.f32 %v30, %v208
    %v233 = vmul.f32 %v31, %v180
    %v234 = vmul.f32 %v32, %v184
    %v235 = vmul.f32 %v33, %v188
    %v236 = vmul.f32 %v34, %v192
    %v237 = vmul.f32 %v35, %v196
    %v238 = vmul.f32 %v36, %v200
    %v239 = vmul.f32 %v37, %v204
    %v240 = vmul.f32 %v38, %v208
    %v241 = vmul.f32 %v39, %v180
    %v242 = vmul.f32 %v40, %v184
    %v243 = vmul.f32 %v41, %v188
    %v244 = vmul.f32 %v42, %v192
    %v245 = vmul.f32 %v43, %v196
    %v246 = vmul.f32 %v44, %v200
    %v247 = vmul.f32 %v45, %v204
    %v248 = vmul.f32 %v46, %v208
    %v249 = vmul.f32 %v47, %v180
    %v250 = vmul.f32 %v48, %v184
    %v251 = vmul.f32 %v49, %v188
    %v252 = vmul.f32 %v50, %v192
    %v253 = vmul.f32 %v51, %v196
    %v254 = vmul.f32 %v52, %v200
    %v255 = vmul.f32 %v53, %v204
    %v256 = vmul.f32 %v54, %v208
    %v257 = vmul.f32 %v55, %v180
    %v258 = vmul.f32 %v56, %v184
    %v259 = vmul.f32 %v57, %v188
    %v260 = vmul.f32 %v58, %v192
    %v261 = vmul.f32 %v59, %v196
    %v262 = vmul.f32 %v60, %v200
    %v263 = vmul.f32 %v61, %v204
    %v264 = vmul.f32 %v62, %v208
    %v265 = vmul.f32 %v63, %v180
    %v266 = vmul.f32 %v64, %v184
    %v267 = vmul.f32 %v65, %v188
    %v268 = vmul.f32 %v66, %v192
    %v269 = vmul.f32 %v67, %v196
    %v270 = vmul.f32 %v68, %v200
    %v271 = vmul.f32 %v69, %v204
    %v272 = vmul.f32 %v70, %v208
    %v273 = vmul.f32 %v71, %v180
    %v274 = vmul.f32 %v72, %v184
    %v275 = vmul.f32 %v73, %v188
    %v276 = vmul.f32 %v74, %v192
    %v277 = vmul.f32 %v75, %v196
    %v278 = vmul.f32 %v76, %v200
    %v279 = vmul.f32 %v77, %v204
    %v280 = vmul.f32 %v78, %v208
    %v281 = vmul.f32 %v79, %v180
    %v282 = vmul.f32 %v80, %v184
    %v283 = vmul.f32 %v81, %v188
    %v284 = vmul.f32 %v82, %v192
    %v285 = vmul.f32 %v83, %v196
    %v286 = vmul.f32 %v84, %v200
    %v287 = vmul.f32 %v85, %v204
    %v288 = vmul.f32 %v86, %v208
    %v289 = vmul.f32 %v87, %v180
    %v290 = vmul.f32 %v88, %v184
    %v291 = vmul.f32 %v89, %v188
    %v292 = vmul.f32 %v90, %v192
    %v293 = vmul.f32 %v91, %v196
    %v294 = vmul.f32 %v92, %v200
    %v295 = vmul.f32 %v93, %v204
    %v296 = vmul.f32 %v94, %v208
    %v297 = vmul.f32 %v95, %v180
    %v298 = vmul.f32 %v96, %v184
    %v299 = vmul.f32 %v97, %v188
    %v300 = vmul.f32 %v98, %v192
    %v301 = vmul.f32 %v99, %v196
    %v302 = vmul.f32 %v100, %v200
    %v303 = vmul.f32 %v101, %v204
    %v304 = vmul.f32 %v102, %v208
    %v305 = vmul.f32 %v103, %v180
    %v306 = vmul.f32 %v104, %v184
    %v307 = vmul.f32 %v105, %v188
    %v308 = vmul.f32 %v106, %v192
    %v309 = vmul.f32 %v107, %v196
    %v310 = vmul.f32 %v108, %v200
    %v311 = vmul.f32 %v109, %v204
    %v312 = vmul.f32 %v110, %v208
    %v313 = vmul.f32 %v111, %v180
    %v314 = vmul.f32 %v112, %v184
    %v315 = vmul.f32 %v113, %v188
    %v316 = vmul.f32 %v114, %v192
    %v317 = vmul.f32 %v115, %v196
    %v318 = vmul.f32 %v116, %v200
    %v319 = vmul.f32 %v117, %v204
    %v320 = vmul.f32 %v118, %v208
    %v321 = vmul.f32 %v119, %v180
    %v322 = vmul.f32 %v120, %v184
    %v323 = vmul.f32 %v121, %v188
    %v324 = vmul.f32 %v122, %v192
    %v325 = vmul.f32 %v123, %v196
    %v326 = vmul.f32 %v124, %v200
    %v327 = vmul.f32 %v125, %v204
    %v328 = vmul.f32 %v126, %v208
    %v329 = vmul.f32 %v127, %v180
    %v330 = vmul.f32 %v128, %v184
    %v331 = vmul.f32 %v129, %v188
    %v332 = vmul.f32 %v130, %v192
    %v333 = vmul.f32 %v131, %v196
    %v334 = vmul.f32 %v132, %v200
    %v335 = vmul.f32 %v133, %v204
    %v336 = vmul.f32 %v134, %v208
    %v337 = vmul.f32 %v135, %v180
    %v338 = vmul.f32 %v136, %v184
    %v339 = vmul.f32 %v137, %v188
    %v340 = vmul.f32 %v138, %v192
    %v341 = vmul.f32 %v139, %v196
    %v342 = vmul.f32 %v140, %v200
    %v343 = vmul.f32 %v141, %v204
    %v344 = vmul.f32 %v142, %v208
    %v345 = vmul.f32 %v143, %v180
    %v346 = vmul.f32 %v144, %v184
    %v347 = vmul.f32 %v145, %v188
    %v348 = vmul.f32 %v146, %v192
    %v349 = vmul.f32 %v147, %v196
    %v350 = vmul.f32 %v148, %v200
    %v351 = vmul.f32 %v149, %v204
    %v352 = vmul.f32 %v150, %v208
    %v353 = vmul.f32 %v151, %v180
    %v354 = vmul.f32 %v152, %v184
    %v355 = vmul.f32 %v153, %v188
    %v356 = vmul.f32 %v154, %v192
    %v357 = vmul.f32 %v155, %v196
    %v358 = vmul.f32 %v156, %v200
    %v359 = vmul.f32 %v157, %v204
    %v360 = vmul.f32 %v158, %v208
    %v361 = vmul.f32 %v159, %v180
    %v362 = vmul.f32 %v160, %v184
    %v363 = vmul.f32 %v161, %v188
    %v364 = vmul.f32 %v162, %v192
    %v365 = vmul.f32 %v163, %v196
    %v366 = vmul.f32 %v164, %v200
    %v367 = vmul.f32 %v165, %v204
    %v368 = vmul.f32 %v166, %v208
    %v369 = vmul.f32 %v167, %v180
    %v370 = vmul.f32 %v168, %v184
    %v371 = vmul.f32 %v169, %v188
    %v372 = vmul.f32 %v170, %v192
    %v373 = vmul.f32 %v171, %v196
    %v374 = vmul.f32 %v172, %v200
    %v375 = vmul.f32 %v173, %v204
    %v376 = vmul.f32 %v174, %v208
    %v377 = vld [vmem:[%s2] sm:$0xff]
    %v378 = vld [vmem:[%s2 + $0x8] sm:$0xff]
    %v379 = vld [vmem:[%s2 + $0x10] sm:$0xff]
    %v380 = vld [vmem:[%s2 + $0x18] sm:$0xff]
    %v381 = vld [vmem:[%s2 + $0x20] sm:$0xff]
    %v382 = vld [vmem:[%s2 + $0x28] sm:$0xff]
    %v383 = vld [vmem:[%s2 + $0x30] sm:$0xff]
    %v384 = vld [vmem:[%s2 + $0x38] sm:$0xff]
    %v385 = vld [vmem:[%s2 + $0x40] sm:$0xff]
    %v386 = vld [vmem:[%s2 + $0x48] sm:$0xff]
    %v387 = vld [vmem:[%s2 + $0x50] sm:$0xff]
    %v388 = vld [vmem:[%s2 + $0x58] sm:$0xff]
    %v389 = vld [vmem:[%s2 + $0x60] sm:$0xff]
    %v390 = vld [vmem:[%s2 + $0x68] sm:$0xff]
    %v391 = vld [vmem:[%s2 + $0x70] sm:$0xff]
    %v392 = vld [vmem:[%s2 + $0x78] sm:$0xff]
    %v393 = vld [vmem:[%s2 + $0x80] sm:$0xff]
    %v394 = vld [vmem:[%s2 + $0x88] sm:$0xff]
    %v395 = vld [vmem:[%s2 + $0x90] sm:$0xff]
    %v396 = vld [vmem:[%s2 + $0x98] sm:$0xff]
    %v397 = vld [vmem:[%s2 + $0xa0] sm:$0xff]
    %v398 = vld [vmem:[%s2 + $0xa8] sm:$0xff]
    %v399 = vld [vmem:[%s2 + $0xb0] sm:$0xff]
    %v400 = vld [vmem:[%s2 + $0xb8] sm:$0xff]
    %v401 = vld [vmem:[%s2 + $0xc0] sm:$0xff]
    %v402 = vld [vmem:[%s2 + $0xc8] sm:$0xff]
    %v403 = vld [vmem:[%s2 + $0xd0] sm:$0xff]
    %v404 = vld [vmem:[%s2 + $0xd8] sm:$0xff]
    %v405 = vld [vmem:[%s2 + $0xe0] sm:$0xff]
    %v406 = vld [vmem:[%s2 + $0xe8] sm:$0xff]
    %v407 = vld [vmem:[%s2 + $0xf0] sm:$0xff]
    %v408 = vld [vmem:[%s2 + $0xf8] sm:$0xff]
    %v409 = vld [vmem:[%s2 + $0x100] sm:$0xff]
    %v410 = vld [vmem:[%s2 + $0x108] sm:$0xff]
    %v411 = vld [vmem:[%s2 + $0x110] sm:$0xff]
    %v412 = vld [vmem:[%s2 + $0x118] sm:$0xff]
    %v413 = vld [vmem:[%s2 + $0x120] sm:$0xff]
    %v414 = vld [vmem:[%s2 + $0x128] sm:$0xff]
    %v415 = vld [vmem:[%s2 + $0x130] sm:$0xff]
    %v416 = vld [vmem:[%s2 + $0x138] sm:$0xff]
    %v417 = vld [vmem:[%s2 + $0x140] sm:$0xff]
    %v418 = vld [vmem:[%s2 + $0x148] sm:$0xff]
    %v419 = vld [vmem:[%s2 + $0x150] sm:$0xff]
    %v420 = vld [vmem:[%s2 + $0x158] sm:$0xff]
    %v421 = vld [vmem:[%s2 + $0x160] sm:$0xff]
    %v422 = vld [vmem:[%s2 + $0x168] sm:$0xff]
    %v423 = vld [vmem:[%s2 + $0x170] sm:$0xff]
    %v424 = vld [vmem:[%s2 + $0x178] sm:$0xff]
    %v425 = vld [vmem:[%s2 + $0x180] sm:$0xff]
    %v426 = vld [vmem:[%s2 + $0x188] sm:$0xff]
    %v427 = vld [vmem:[%s2 + $0x190] sm:$0xff]
    %v428 = vld [vmem:[%s2 + $0x198] sm:$0xff]
    %v429 = vld [vmem:[%s2 + $0x1a0] sm:$0xff]
    %v430 = vld [vmem:[%s2 + $0x1a8] sm:$0xff]
    %v431 = vld [vmem:[%s2 + $0x1b0] sm:$0xff]
    %v432 = vld [vmem:[%s2 + $0x1b8] sm:$0xff]
    %v433 = vld [vmem:[%s2 + $0x1c0] sm:$0xff]
    %v434 = vld [vmem:[%s2 + $0x1c8] sm:$0xff]
    %v435 = vld [vmem:[%s2 + $0x1d0] sm:$0xff]
    %v436 = vld [vmem:[%s2 + $0x1d8] sm:$0xff]
    %v437 = vld [vmem:[%s2 + $0x1e0] sm:$0xff]
    %v438 = vld [vmem:[%s2 + $0x1e8] sm:$0xff]
    %v439 = vld [vmem:[%s2 + $0x1f0] sm:$0xff]
    %v440 = vld [vmem:[%s2 + $0x1f8] sm:$0xff]
    %v441 = vld [vmem:[%s2 + $0x200] sm:$0xff]
    %v442 = vld [vmem:[%s2 + $0x208] sm:$0xff]
    %v443 = vld [vmem:[%s2 + $0x210] sm:$0xff]
    %v444 = vld [vmem:[%s2 + $0x218] sm:$0xff]
    %v445 = vld [vmem:[%s2 + $0x220] sm:$0xff]
    %v446 = vld [vmem:[%s2 + $0x228] sm:$0xff]
    %v447 = vld [vmem:[%s2 + $0x230] sm:$0xff]
    %v448 = vld [vmem:[%s2 + $0x238] sm:$0xff]
    %v449 = vld [vmem:[%s2 + $0x240] sm:$0xff]
    %v450 = vld [vmem:[%s2 + $0x248] sm:$0xff]
    %v451 = vld [vmem:[%s2 + $0x250] sm:$0xff]
    %v452 = vld [vmem:[%s2 + $0x258] sm:$0xff]
    %v453 = vld [vmem:[%s2 + $0x260] sm:$0xff]
    %v454 = vld [vmem:[%s2 + $0x268] sm:$0xff]
    %v455 = vld [vmem:[%s2 + $0x270] sm:$0xff]
    %v456 = vld [vmem:[%s2 + $0x278] sm:$0xff]
    %v457 = vld [vmem:[%s2 + $0x280] sm:$0xff]
    %v458 = vld [vmem:[%s2 + $0x288] sm:$0xff]
    %v459 = vld [vmem:[%s2 + $0x290] sm:$0xff]
    %v460 = vld [vmem:[%s2 + $0x298] sm:$0xff]
    %v461 = vld [vmem:[%s2 + $0x2a0] sm:$0xff]
    %v462 = vld [vmem:[%s2 + $0x2a8] sm:$0xff]
    %v463 = vld [vmem:[%s2 + $0x2b0] sm:$0xff]
    %v464 = vld [vmem:[%s2 + $0x2b8] sm:$0xff]
    %v465 = vld [vmem:[%s2 + $0x2c0] sm:$0xff]
    %v466 = vld [vmem:[%s2 + $0x2c8] sm:$0xff]
    %v467 = vld [vmem:[%s2 + $0x2d0] sm:$0xff]
    %v468 = vld [vmem:[%s2 + $0x2d8] sm:$0xff]
    %v469 = vld [vmem:[%s2 + $0x2e0] sm:$0xff]
    %v470 = vld [vmem:[%s2 + $0x2e8] sm:$0xff]
    %v471 = vld [vmem:[%s2 + $0x2f0] sm:$0xff]
    %v472 = vld [vmem:[%s2 + $0x2f8] sm:$0xff]
    %v473 = vld [vmem:[%s2 + $0x300] sm:$0xff]
    %v474 = vld [vmem:[%s2 + $0x308] sm:$0xff]
    %v475 = vld [vmem:[%s2 + $0x310] sm:$0xff]
    %v476 = vld [vmem:[%s2 + $0x318] sm:$0xff]
    %v477 = vld [vmem:[%s2 + $0x320] sm:$0xff]
    %v478 = vld [vmem:[%s2 + $0x328] sm:$0xff]
    %v479 = vld [vmem:[%s2 + $0x330] sm:$0xff]
    %v480 = vld [vmem:[%s2 + $0x338] sm:$0xff]
    %v481 = vld [vmem:[%s2 + $0x340] sm:$0xff]
    %v482 = vld [vmem:[%s2 + $0x348] sm:$0xff]
    %v483 = vld [vmem:[%s2 + $0x350] sm:$0xff]
    %v484 = vld [vmem:[%s2 + $0x358] sm:$0xff]
    %v485 = vld [vmem:[%s2 + $0x360] sm:$0xff]
    %v486 = vld [vmem:[%s2 + $0x368] sm:$0xff]
    %v487 = vld [vmem:[%s2 + $0x370] sm:$0xff]
    %v488 = vld [vmem:[%s2 + $0x378] sm:$0xff]
    %v489 = vld [vmem:[%s2 + $0x380] sm:$0xff]
    %v490 = vld [vmem:[%s2 + $0x388] sm:$0xff]
    %v491 = vld [vmem:[%s2 + $0x390] sm:$0xff]
    %v492 = vld [vmem:[%s2 + $0x398] sm:$0xff]
    %v493 = vld [vmem:[%s2 + $0x3a0] sm:$0xff]
    %v494 = vld [vmem:[%s2 + $0x3a8] sm:$0xff]
    %v495 = vld [vmem:[%s2 + $0x3b0] sm:$0xff]
    %v496 = vld [vmem:[%s2 + $0x3b8] sm:$0xff]
    %v497 = vld [vmem:[%s2 + $0x3c0] sm:$0xff]
    %v498 = vld [vmem:[%s2 + $0x3c8] sm:$0xff]
    %v499 = vld [vmem:[%s2 + $0x3d0] sm:$0xff]
    %v500 = vld [vmem:[%s2 + $0x3d8] sm:$0xff]
    %v501 = vld [vmem:[%s2 + $0x3e0] sm:$0xff]
    %v502 = vld [vmem:[%s2 + $0x3e8] sm:$0xff]
    %v503 = vld [vmem:[%s2 + $0x3f0] sm:$0xff]
    %v504 = vld [vmem:[%s2 + $0x3f8] sm:$0xff]
    %v505 = vld [vmem:[%s2 + $0x400] sm:$0xff]
    %v506 = vld [vmem:[%s2 + $0x408] sm:$0xff]
    %v507 = vld [vmem:[%s2 + $0x410] sm:$0xff]
    %v508 = vld [vmem:[%s2 + $0x418] sm:$0xff]
    %v509 = vld [vmem:[%s2 + $0x420] sm:$0xff]
    %v510 = vld [vmem:[%s2 + $0x428] sm:$0xff]
    %v511 = vld [vmem:[%s2 + $0x430] sm:$0xff]
    %v512 = vld [vmem:[%s2 + $0x438] sm:$0xff]
    %v513 = vld [vmem:[%s2 + $0x440] sm:$0xff]
    %v514 = vld [vmem:[%s2 + $0x448] sm:$0xff]
    %v515 = vld [vmem:[%s2 + $0x450] sm:$0xff]
    %v516 = vld [vmem:[%s2 + $0x458] sm:$0xff]
    %v517 = vld [vmem:[%s2 + $0x460] sm:$0xff]
    %v518 = vld [vmem:[%s2 + $0x468] sm:$0xff]
    %v519 = vld [vmem:[%s2 + $0x470] sm:$0xff]
    %v520 = vld [vmem:[%s2 + $0x478] sm:$0xff]
    %v521 = vld [vmem:[%s2 + $0x480] sm:$0xff]
    %v522 = vld [vmem:[%s2 + $0x488] sm:$0xff]
    %v523 = vld [vmem:[%s2 + $0x490] sm:$0xff]
    %v524 = vld [vmem:[%s2 + $0x498] sm:$0xff]
    %v525 = vld [vmem:[%s2 + $0x4a0] sm:$0xff]
    %v526 = vld [vmem:[%s2 + $0x4a8] sm:$0xff]
    %v527 = vld [vmem:[%s2 + $0x4b0] sm:$0xff]
    %v528 = vld [vmem:[%s2 + $0x4b8] sm:$0xff]
    %v529 = vld [vmem:[%s2 + $0x4c0] sm:$0xff]
    %v530 = vld [vmem:[%s2 + $0x4c8] sm:$0xff]
    %v531 = vld [vmem:[%s2 + $0x4d0] sm:$0xff]
    %v532 = vld [vmem:[%s2 + $0x4d8] sm:$0xff]
    %v533 = vld [vmem:[%s2 + $0x4e0] sm:$0xff]
    %v534 = vld [vmem:[%s2 + $0x4e8] sm:$0xff]
    %v535 = vld [vmem:[%s2 + $0x4f0] sm:$0xff]
    %v536 = vld [vmem:[%s2 + $0x4f8] sm:$0xff]
    %v537 = vld [vmem:[%s2 + $0x500] sm:$0xff]
    %v538 = vld [vmem:[%s2 + $0x508] sm:$0xff]
    %v539 = vld [vmem:[%s2 + $0x510] sm:$0xff]
    %v540 = vld [vmem:[%s2 + $0x518] sm:$0xff]
    %v541 = vld [vmem:[%s2 + $0x520] sm:$0xff]
    %v542 = vld [vmem:[%s2 + $0x528] sm:$0xff]
    %v543 = vld [vmem:[%s2 + $0x530] sm:$0xff]
    %v544 = vld [vmem:[%s2 + $0x538] sm:$0xff]
    %v545 = vld [vmem:[%s2 + $0x540] sm:$0xff]
    %v546 = vld [vmem:[%s2 + $0x548] sm:$0xff]
    %v547 = vld [vmem:[%s2 + $0x550] sm:$0xff]
    %v548 = vld [vmem:[%s2 + $0x558] sm:$0xff]
    %v549 = vld [vmem:[%s2 + $0x560] sm:$0xff]
    %v550 = vld [vmem:[%s2 + $0x568] sm:$0xff]
    %v551 = vld [vmem:[%s2 + $0x570] sm:$0xff]
    %v552 = vld [vmem:[%s2 + $0x578] sm:$0xff]
    %v553 = vld [vmem:[%s2 + $0x580] sm:$0xff]
    %v554 = vld [vmem:[%s2 + $0x588] sm:$0xff]
    %v555 = vld [vmem:[%s2 + $0x590] sm:$0xff]
    %v556 = vld [vmem:[%s2 + $0x598] sm:$0xff]
    %v557 = vld [vmem:[%s2 + $0x5a0] sm:$0xff]
    %v558 = vld [vmem:[%s2 + $0x5a8] sm:$0xff]
    %v559 = vld [vmem:[%s2 + $0x5b0] sm:$0xff]
    %v560 = vld [vmem:[%s2 + $0x5b8] sm:$0xff]
    %v561 = vld [vmem:[%s2 + $0x5c0] sm:$0xff]
    %v562 = vld [vmem:[%s2 + $0x5c8] sm:$0xff]
    %v563 = vld [vmem:[%s2 + $0x5d0] sm:$0xff]
    %v564 = vld [vmem:[%s2 + $0x5d8] sm:$0xff]
    %v565 = vld [vmem:[%s2 + $0x5e0] sm:$0xff]
    %v566 = vld [vmem:[%s2 + $0x5e8] sm:$0xff]
    %v567 = vld [vmem:[%s2 + $0x5f0] sm:$0xff]
    %v568 = vld [vmem:[%s2 + $0x5f8] sm:$0xff]
    %v569 = vld [vmem:[%s2 + $0x600] sm:$0xff]
    %v570 = vld [vmem:[%s2 + $0x608] sm:$0xff]
    %v571 = vld [vmem:[%s2 + $0x610] sm:$0xff]
    %v572 = vld [vmem:[%s2 + $0x618] sm:$0xff]
    %v573 = vld [vmem:[%s2 + $0x620] sm:$0xff]
    %v574 = vld [vmem:[%s2 + $0x628] sm:$0xff]
    %v575 = vld [vmem:[%s2 + $0x630] sm:$0xff]
    %v576 = vld [vmem:[%s2 + $0x638] sm:$0xff]
    %v577 = vld [vmem:[%s2 + $0x640] sm:$0xff]
    %v578 = vld [vmem:[%s2 + $0x648] sm:$0xff]
    %v579 = vld [vmem:[%s2 + $0x650] sm:$0xff]
    %v580 = vld [vmem:[%s2 + $0x658] sm:$0xff]
    %v581 = vld [vmem:[%s2 + $0x660] sm:$0xff]
    %v582 = vld [vmem:[%s2 + $0x668] sm:$0xff]
    %v583 = vld [vmem:[%s2 + $0x670] sm:$0xff]
    %v584 = vld [vmem:[%s2 + $0x678] sm:$0xff]
    %v585 = vld [vmem:[%s2 + $0x680] sm:$0xff]
    %v586 = vld [vmem:[%s2 + $0x688] sm:$0xff]
    %v587 = vld [vmem:[%s2 + $0x690] sm:$0xff]
    %v588 = vld [vmem:[%s2 + $0x698] sm:$0xff]
    %v589 = vld [vmem:[%s2 + $0x6a0] sm:$0xff]
    %v590 = vld [vmem:[%s2 + $0x6a8] sm:$0xff]
    %v591 = vld [vmem:[%s2 + $0x6b0] sm:$0xff]
    %v592 = vld [vmem:[%s2 + $0x6b8] sm:$0xff]
    %v593 = vld [vmem:[%s2 + $0x6c0] sm:$0xff]
    %v594 = vld [vmem:[%s2 + $0x6c8] sm:$0xff]
    %v595 = vld [vmem:[%s2 + $0x6d0] sm:$0xff]
    %v596 = vld [vmem:[%s2 + $0x6d8] sm:$0xff]
    %v597 = vld [vmem:[%s2 + $0x6e0] sm:$0xff]
    %v598 = vld [vmem:[%s2 + $0x6e8] sm:$0xff]
    %v599 = vld [vmem:[%s2 + $0x6f0] sm:$0xff]
    %v600 = vld [vmem:[%s2 + $0x6f8] sm:$0xff]
    %v601 = vld [vmem:[%s2 + $0x700] sm:$0xff]
    %v602 = vld [vmem:[%s2 + $0x708] sm:$0xff]
    %v603 = vld [vmem:[%s2 + $0x710] sm:$0xff]
    %v604 = vld [vmem:[%s2 + $0x718] sm:$0xff]
    %v605 = vld [vmem:[%s2 + $0x720] sm:$0xff]
    %v606 = vld [vmem:[%s2 + $0x728] sm:$0xff]
    %v607 = vld [vmem:[%s2 + $0x730] sm:$0xff]
    %v608 = vld [vmem:[%s2 + $0x738] sm:$0xff]
    %v609 = vld [vmem:[%s2 + $0x740] sm:$0xff]
    %v610 = vld [vmem:[%s2 + $0x748] sm:$0xff]
    %v611 = vld [vmem:[%s2 + $0x750] sm:$0xff]
    %v612 = vld [vmem:[%s2 + $0x758] sm:$0xff]
    %v613 = vld [vmem:[%s2 + $0x760] sm:$0xff]
    %v614 = vld [vmem:[%s2 + $0x768] sm:$0xff]
    %v615 = vld [vmem:[%s2 + $0x770] sm:$0xff]
    %v616 = vld [vmem:[%s2 + $0x778] sm:$0xff]
    %vm617 = vcmask 523264
    %v619 = vsel %vm617, %v224, 0
    %v622 = vsel %vm617, %v232, 0
    %v625 = vsel %vm617, %v240, 0
    %v628 = vsel %vm617, %v248, 0
    %v631 = vsel %vm617, %v256, 0
    %v634 = vsel %vm617, %v264, 0
    %v637 = vsel %vm617, %v272, 0
    %v640 = vsel %vm617, %v280, 0
    %v643 = vsel %vm617, %v288, 0
    %v646 = vsel %vm617, %v296, 0
    %v649 = vsel %vm617, %v304, 0
    %v652 = vsel %vm617, %v312, 0
    %v655 = vsel %vm617, %v320, 0
    %v658 = vsel %vm617, %v328, 0
    %v661 = vsel %vm617, %v336, 0
    %v664 = vsel %vm617, %v344, 0
    %v667 = vsel %vm617, %v352, 0
    %v670 = vsel %vm617, %v360, 0
    %v673 = vsel %vm617, %v368, 0
    %v676 = vsel %vm617, %v376, 0
    %678 = vmatprep.subr.mxu0 %v408
    %679 = vmatpush1.msra.mxu0 %v407
    %680 = vmatprep.subr.mxu0 %v406
    %681 = vmatpush1.msra.mxu0 %v405
    %682 = vmatprep.subr.mxu0 %v404
    %683 = vmatpush1.msra.mxu0 %v403
    %684 = vmatprep.subr.mxu0 %v402
    %685 = vmatpush1.msra.mxu0 %v401
    %686 = vmatprep.subr.mxu0 %v400
    %687 = vmatpush1.msra.mxu0 %v399
    %688 = vmatprep.subr.mxu0 %v398
    %689 = vmatpush1.msra.mxu0 %v397
    %690 = vmatprep.subr.mxu0 %v396
    %691 = vmatpush1.msra.mxu0 %v395
    %692 = vmatprep.subr.mxu0 %v394
    %693 = vmatpush1.msra.mxu0 %v393
    %694 = vmatprep.subr.mxu0 %v392
    %695 = vmatpush1.msra.mxu0 %v391
    %696 = vmatprep.subr.mxu0 %v390
    %697 = vmatpush1.msra.mxu0 %v389
    %698 = vmatprep.subr.mxu0 %v388
    %699 = vmatpush1.msra.mxu0 %v387
    %700 = vmatprep.subr.mxu0 %v386
    %701 = vmatpush1.msra.mxu0 %v385
    %702 = vmatprep.subr.mxu0 %v384
    %703 = vmatpush1.msra.mxu0 %v383
    %704 = vmatprep.subr.mxu0 %v382
    %705 = vmatpush1.msra.mxu0 %v381
    %706 = vmatprep.subr.mxu0 %v380
    %707 = vmatpush1.msra.mxu0 %v379
    %708 = vmatprep.subr.mxu0 %v378
    %709 = vmatpush1.msra.mxu0 %v377
    %710 = vmatprep.subr.mxu0 %v440
    %711 = vmatpush2.msra.mxu0 %v439
    %712 = vmatprep.subr.mxu0 %v438
    %713 = vmatpush2.msra.mxu0 %v437
    %714 = vmatprep.subr.mxu0 %v436
    %715 = vmatpush2.msra.mxu0 %v435
    %716 = vmatprep.subr.mxu0 %v434
    %717 = vmatpush2.msra.mxu0 %v433
    %718 = vmatprep.subr.mxu0 %v432
    %719 = vmatpush2.msra.mxu0 %v431
    %720 = vmatprep.subr.mxu0 %v430
    %721 = vmatpush2.msra.mxu0 %v429
    %722 = vmatprep.subr.mxu0 %v428
    %723 = vmatpush2.msra.mxu0 %v427
    %724 = vmatprep.subr.mxu0 %v426
    %725 = vmatpush2.msra.mxu0 %v425
    %726 = vmatprep.subr.mxu0 %v424
    %727 = vmatpush2.msra.mxu0 %v423
    %728 = vmatprep.subr.mxu0 %v422
    %729 = vmatpush2.msra.mxu0 %v421
    %730 = vmatprep.subr.mxu0 %v420
    %731 = vmatpush2.msra.mxu0 %v419
    %732 = vmatprep.subr.mxu0 %v418
    %733 = vmatpush2.msra.mxu0 %v417
    %734 = vmatprep.subr.mxu0 %v416
    %735 = vmatpush2.msra.mxu0 %v415
    %736 = vmatprep.subr.mxu0 %v414
    %737 = vmatpush2.msra.mxu0 %v413
    %738 = vmatprep.subr.mxu0 %v412
    %739 = vmatpush2.msra.mxu0 %v411
    %740 = vmatprep.subr.mxu0 %v410
    %741 = vmatpush2.msra.mxu0 %v409
    %742 = vmatprep.mubr.f32.mxu0 %v218
    %743 = vmatmul.mubr.f32.gmra.mxu0 %v217
    %v744 = vpop.f32.mrf.mxu0
    %v745 = vadd.f32 0.0, %v744
    %v746 = vpop.f32.mrf.mxu0
    %v747 = vadd.f32 0.0, %v746
    %748 = vmatprep.mubr.f32.mxu0 %v226
    %749 = vmatmul.mubr.f32.gmra.mxu0 %v225
    %v750 = vpop.f32.mrf.mxu0
    %v751 = vadd.f32 0.0, %v750
    %v752 = vpop.f32.mrf.mxu0
    %v753 = vadd.f32 0.0, %v752
    %754 = vmatprep.mubr.f32.mxu0 %v234
    %755 = vmatmul.mubr.f32.gmra.mxu0 %v233
    %v756 = vpop.f32.mrf.mxu0
    %v757 = vadd.f32 0.0, %v756
    %v758 = vpop.f32.mrf.mxu0
    %v759 = vadd.f32 0.0, %v758
    %760 = vmatprep.mubr.f32.mxu0 %v242
    %761 = vmatmul.mubr.f32.gmra.mxu0 %v241
    %v762 = vpop.f32.mrf.mxu0
    %v763 = vadd.f32 0.0, %v762
    %v764 = vpop.f32.mrf.mxu0
    %v765 = vadd.f32 0.0, %v764
    %766 = vmatprep.mubr.f32.mxu0 %v250
    %767 = vmatmul.mubr.f32.gmra.mxu0 %v249
    %v768 = vpop.f32.mrf.mxu0
    %v769 = vadd.f32 0.0, %v768
    %v770 = vpop.f32.mrf.mxu0
    %v771 = vadd.f32 0.0, %v770
    %772 = vmatprep.mubr.f32.mxu0 %v258
    %773 = vmatmul.mubr.f32.gmra.mxu0 %v257
    %v774 = vpop.f32.mrf.mxu0
    %v775 = vadd.f32 0.0, %v774
    %v776 = vpop.f32.mrf.mxu0
    %v777 = vadd.f32 0.0, %v776
    %778 = vmatprep.mubr.f32.mxu0 %v266
    %779 = vmatmul.mubr.f32.gmra.mxu0 %v265
    %v780 = vpop.f32.mrf.mxu0
    %v781 = vadd.f32 0.0, %v780
    %v782 = vpop.f32.mrf.mxu0
    %v783 = vadd.f32 0.0, %v782
    %784 = vmatprep.mubr.f32.mxu0 %v274
    %785 = vmatmul.mubr.f32.gmra.mxu0 %v273
    %v786 = vpop.f32.mrf.mxu0
    %v787 = vadd.f32 0.0, %v786
    %v788 = vpop.f32.mrf.mxu0
    %v789 = vadd.f32 0.0, %v788
    %790 = vmatprep.mubr.f32.mxu0 %v282
    %791 = vmatmul.mubr.f32.gmra.mxu0 %v281
    %v792 = vpop.f32.mrf.mxu0
    %v793 = vadd.f32 0.0, %v792
    %v794 = vpop.f32.mrf.mxu0
    %v795 = vadd.f32 0.0, %v794
    %796 = vmatprep.mubr.f32.mxu0 %v290
    %797 = vmatmul.mubr.f32.gmra.mxu0 %v289
    %v798 = vpop.f32.mrf.mxu0
    %v799 = vadd.f32 0.0, %v798
    %v800 = vpop.f32.mrf.mxu0
    %v801 = vadd.f32 0.0, %v800
    %802 = vmatprep.mubr.f32.mxu0 %v298
    %803 = vmatmul.mubr.f32.gmra.mxu0 %v297
    %v804 = vpop.f32.mrf.mxu0
    %v805 = vadd.f32 0.0, %v804
    %v806 = vpop.f32.mrf.mxu0
    %v807 = vadd.f32 0.0, %v806
    %808 = vmatprep.mubr.f32.mxu0 %v306
    %809 = vmatmul.mubr.f32.gmra.mxu0 %v305
    %v810 = vpop.f32.mrf.mxu0
    %v811 = vadd.f32 0.0, %v810
    %v812 = vpop.f32.mrf.mxu0
    %v813 = vadd.f32 0.0, %v812
    %814 = vmatprep.mubr.f32.mxu0 %v314
    %815 = vmatmul.mubr.f32.gmra.mxu0 %v313
    %v816 = vpop.f32.mrf.mxu0
    %v817 = vadd.f32 0.0, %v816
    %v818 = vpop.f32.mrf.mxu0
    %v819 = vadd.f32 0.0, %v818
    %820 = vmatprep.mubr.f32.mxu0 %v322
    %821 = vmatmul.mubr.f32.gmra.mxu0 %v321
    %v822 = vpop.f32.mrf.mxu0
    %v823 = vadd.f32 0.0, %v822
    %v824 = vpop.f32.mrf.mxu0
    %v825 = vadd.f32 0.0, %v824
    %826 = vmatprep.mubr.f32.mxu0 %v330
    %827 = vmatmul.mubr.f32.gmra.mxu0 %v329
    %v828 = vpop.f32.mrf.mxu0
    %v829 = vadd.f32 0.0, %v828
    %v830 = vpop.f32.mrf.mxu0
    %v831 = vadd.f32 0.0, %v830
    %832 = vmatprep.mubr.f32.mxu0 %v338
    %833 = vmatmul.mubr.f32.gmra.mxu0 %v337
    %v834 = vpop.f32.mrf.mxu0
    %v835 = vadd.f32 0.0, %v834
    %v836 = vpop.f32.mrf.mxu0
    %v837 = vadd.f32 0.0, %v836
    %838 = vmatprep.mubr.f32.mxu0 %v346
    %839 = vmatmul.mubr.f32.gmra.mxu0 %v345
    %v840 = vpop.f32.mrf.mxu0
    %v841 = vadd.f32 0.0, %v840
    %v842 = vpop.f32.mrf.mxu0
    %v843 = vadd.f32 0.0, %v842
    %844 = vmatprep.mubr.f32.mxu0 %v354
    %845 = vmatmul.mubr.f32.gmra.mxu0 %v353
    %v846 = vpop.f32.mrf.mxu0
    %v847 = vadd.f32 0.0, %v846
    %v848 = vpop.f32.mrf.mxu0
    %v849 = vadd.f32 0.0, %v848
    %850 = vmatprep.mubr.f32.mxu0 %v362
    %851 = vmatmul.mubr.f32.gmra.mxu0 %v361
    %v852 = vpop.f32.mrf.mxu0
    %v853 = vadd.f32 0.0, %v852
    %v854 = vpop.f32.mrf.mxu0
    %v855 = vadd.f32 0.0, %v854
    %856 = vmatprep.mubr.f32.mxu0 %v370
    %857 = vmatmul.mubr.f32.gmra.mxu0 %v369
    %v858 = vpop.f32.mrf.mxu0
    %v859 = vadd.f32 0.0, %v858
    %v860 = vpop.f32.mrf.mxu0
    %v861 = vadd.f32 0.0, %v860
    %862 = vdwg.mxu0
    %863 = vmatprep.subr.mxu0 %v472
    %864 = vmatpush1.msra.mxu0 %v471
    %865 = vmatprep.subr.mxu0 %v470
    %866 = vmatpush1.msra.mxu0 %v469
    %867 = vmatprep.subr.mxu0 %v468
    %868 = vmatpush1.msra.mxu0 %v467
    %869 = vmatprep.subr.mxu0 %v466
    %870 = vmatpush1.msra.mxu0 %v465
    %871 = vmatprep.subr.mxu0 %v464
    %872 = vmatpush1.msra.mxu0 %v463
    %873 = vmatprep.subr.mxu0 %v462
    %874 = vmatpush1.msra.mxu0 %v461
    %875 = vmatprep.subr.mxu0 %v460
    %876 = vmatpush1.msra.mxu0 %v459
    %877 = vmatprep.subr.mxu0 %v458
    %878 = vmatpush1.msra.mxu0 %v457
    %879 = vmatprep.subr.mxu0 %v456
    %880 = vmatpush1.msra.mxu0 %v455
    %881 = vmatprep.subr.mxu0 %v454
    %882 = vmatpush1.msra.mxu0 %v453
    %883 = vmatprep.subr.mxu0 %v452
    %884 = vmatpush1.msra.mxu0 %v451
    %885 = vmatprep.subr.mxu0 %v450
    %886 = vmatpush1.msra.mxu0 %v449
    %887 = vmatprep.subr.mxu0 %v448
    %888 = vmatpush1.msra.mxu0 %v447
    %889 = vmatprep.subr.mxu0 %v446
    %890 = vmatpush1.msra.mxu0 %v445
    %891 = vmatprep.subr.mxu0 %v444
    %892 = vmatpush1.msra.mxu0 %v443
    %893 = vmatprep.subr.mxu0 %v442
    %894 = vmatpush1.msra.mxu0 %v441
    %895 = vmatprep.subr.mxu0 %v504
    %896 = vmatpush2.msra.mxu0 %v503
    %897 = vmatprep.subr.mxu0 %v502
    %898 = vmatpush2.msra.mxu0 %v501
    %899 = vmatprep.subr.mxu0 %v500
    %900 = vmatpush2.msra.mxu0 %v499
    %901 = vmatprep.subr.mxu0 %v498
    %902 = vmatpush2.msra.mxu0 %v497
    %903 = vmatprep.subr.mxu0 %v496
    %904 = vmatpush2.msra.mxu0 %v495
    %905 = vmatprep.subr.mxu0 %v494
    %906 = vmatpush2.msra.mxu0 %v493
    %907 = vmatprep.subr.mxu0 %v492
    %908 = vmatpush2.msra.mxu0 %v491
    %909 = vmatprep.subr.mxu0 %v490
    %910 = vmatpush2.msra.mxu0 %v489
    %911 = vmatprep.subr.mxu0 %v488
    %912 = vmatpush2.msra.mxu0 %v487
    %913 = vmatprep.subr.mxu0 %v486
    %914 = vmatpush2.msra.mxu0 %v485
    %915 = vmatprep.subr.mxu0 %v484
    %916 = vmatpush2.msra.mxu0 %v483
    %917 = vmatprep.subr.mxu0 %v482
    %918 = vmatpush2.msra.mxu0 %v481
    %919 = vmatprep.subr.mxu0 %v480
    %920 = vmatpush2.msra.mxu0 %v479
    %921 = vmatprep.subr.mxu0 %v478
    %922 = vmatpush2.msra.mxu0 %v477
    %923 = vmatprep.subr.mxu0 %v476
    %924 = vmatpush2.msra.mxu0 %v475
    %925 = vmatprep.subr.mxu0 %v474
    %926 = vmatpush2.msra.mxu0 %v473
    %927 = vmatprep.mubr.f32.mxu0 %v220
    %928 = vmatmul.mubr.f32.gmra.mxu0 %v219
    %v929 = vpop.f32.mrf.mxu0
    %v930 = vadd.f32 %v745, %v929
    %v931 = vpop.f32.mrf.mxu0
    %v932 = vadd.f32 %v747, %v931
    %933 = vmatprep.mubr.f32.mxu0 %v228
    %934 = vmatmul.mubr.f32.gmra.mxu0 %v227
    %v935 = vpop.f32.mrf.mxu0
    %v936 = vadd.f32 %v751, %v935
    %v937 = vpop.f32.mrf.mxu0
    %v938 = vadd.f32 %v753, %v937
    %939 = vmatprep.mubr.f32.mxu0 %v236
    %940 = vmatmul.mubr.f32.gmra.mxu0 %v235
    %v941 = vpop.f32.mrf.mxu0
    %v942 = vadd.f32 %v757, %v941
    %v943 = vpop.f32.mrf.mxu0
    %v944 = vadd.f32 %v759, %v943
    %945 = vmatprep.mubr.f32.mxu0 %v244
    %946 = vmatmul.mubr.f32.gmra.mxu0 %v243
    %v947 = vpop.f32.mrf.mxu0
    %v948 = vadd.f32 %v763, %v947
    %v949 = vpop.f32.mrf.mxu0
    %v950 = vadd.f32 %v765, %v949
    %951 = vmatprep.mubr.f32.mxu0 %v252
    %952 = vmatmul.mubr.f32.gmra.mxu0 %v251
    %v953 = vpop.f32.mrf.mxu0
    %v954 = vadd.f32 %v769, %v953
    %v955 = vpop.f32.mrf.mxu0
    %v956 = vadd.f32 %v771, %v955
    %957 = vmatprep.mubr.f32.mxu0 %v260
    %958 = vmatmul.mubr.f32.gmra.mxu0 %v259
    %v959 = vpop.f32.mrf.mxu0
    %v960 = vadd.f32 %v775, %v959
    %v961 = vpop.f32.mrf.mxu0
    %v962 = vadd.f32 %v777, %v961
    %963 = vmatprep.mubr.f32.mxu0 %v268
    %964 = vmatmul.mubr.f32.gmra.mxu0 %v267
    %v965 = vpop.f32.mrf.mxu0
    %v966 = vadd.f32 %v781, %v965
    %v967 = vpop.f32.mrf.mxu0
    %v968 = vadd.f32 %v783, %v967
    %969 = vmatprep.mubr.f32.mxu0 %v276
    %970 = vmatmul.mubr.f32.gmra.mxu0 %v275
    %v971 = vpop.f32.mrf.mxu0
    %v972 = vadd.f32 %v787, %v971
    %v973 = vpop.f32.mrf.mxu0
    %v974 = vadd.f32 %v789, %v973
    %975 = vmatprep.mubr.f32.mxu0 %v284
    %976 = vmatmul.mubr.f32.gmra.mxu0 %v283
    %v977 = vpop.f32.mrf.mxu0
    %v978 = vadd.f32 %v793, %v977
    %v979 = vpop.f32.mrf.mxu0
    %v980 = vadd.f32 %v795, %v979
    %981 = vmatprep.mubr.f32.mxu0 %v292
    %982 = vmatmul.mubr.f32.gmra.mxu0 %v291
    %v983 = vpop.f32.mrf.mxu0
    %v984 = vadd.f32 %v799, %v983
    %v985 = vpop.f32.mrf.mxu0
    %v986 = vadd.f32 %v801, %v985
    %987 = vmatprep.mubr.f32.mxu0 %v300
    %988 = vmatmul.mubr.f32.gmra.mxu0 %v299
    %v989 = vpop.f32.mrf.mxu0
    %v990 = vadd.f32 %v805, %v989
    %v991 = vpop.f32.mrf.mxu0
    %v992 = vadd.f32 %v807, %v991
    %993 = vmatprep.mubr.f32.mxu0 %v308
    %994 = vmatmul.mubr.f32.gmra.mxu0 %v307
    %v995 = vpop.f32.mrf.mxu0
    %v996 = vadd.f32 %v811, %v995
    %v997 = vpop.f32.mrf.mxu0
    %v998 = vadd.f32 %v813, %v997
    %999 = vmatprep.mubr.f32.mxu0 %v316
    %1000 = vmatmul.mubr.f32.gmra.mxu0 %v315
    %v1001 = vpop.f32.mrf.mxu0
    %v1002 = vadd.f32 %v817, %v1001
    %v1003 = vpop.f32.mrf.mxu0
    %v1004 = vadd.f32 %v819, %v1003
    %1005 = vmatprep.mubr.f32.mxu0 %v324
    %1006 = vmatmul.mubr.f32.gmra.mxu0 %v323
    %v1007 = vpop.f32.mrf.mxu0
    %v1008 = vadd.f32 %v823, %v1007
    %v1009 = vpop.f32.mrf.mxu0
    %v1010 = vadd.f32 %v825, %v1009
    %1011 = vmatprep.mubr.f32.mxu0 %v332
    %1012 = vmatmul.mubr.f32.gmra.mxu0 %v331
    %v1013 = vpop.f32.mrf.mxu0
    %v1014 = vadd.f32 %v829, %v1013
    %v1015 = vpop.f32.mrf.mxu0
    %v1016 = vadd.f32 %v831, %v1015
    %1017 = vmatprep.mubr.f32.mxu0 %v340
    %1018 = vmatmul.mubr.f32.gmra.mxu0 %v339
    %v1019 = vpop.f32.mrf.mxu0
    %v1020 = vadd.f32 %v835, %v1019
    %v1021 = vpop.f32.mrf.mxu0
    %v1022 = vadd.f32 %v837, %v1021
    %1023 = vmatprep.mubr.f32.mxu0 %v348
    %1024 = vmatmul.mubr.f32.gmra.mxu0 %v347
    %v1025 = vpop.f32.mrf.mxu0
    %v1026 = vadd.f32 %v841, %v1025
    %v1027 = vpop.f32.mrf.mxu0
    %v1028 = vadd.f32 %v843, %v1027
    %1029 = vmatprep.mubr.f32.mxu0 %v356
    %1030 = vmatmul.mubr.f32.gmra.mxu0 %v355
    %v1031 = vpop.f32.mrf.mxu0
    %v1032 = vadd.f32 %v847, %v1031
    %v1033 = vpop.f32.mrf.mxu0
    %v1034 = vadd.f32 %v849, %v1033
    %1035 = vmatprep.mubr.f32.mxu0 %v364
    %1036 = vmatmul.mubr.f32.gmra.mxu0 %v363
    %v1037 = vpop.f32.mrf.mxu0
    %v1038 = vadd.f32 %v853, %v1037
    %v1039 = vpop.f32.mrf.mxu0
    %v1040 = vadd.f32 %v855, %v1039
    %1041 = vmatprep.mubr.f32.mxu0 %v372
    %1042 = vmatmul.mubr.f32.gmra.mxu0 %v371
    %v1043 = vpop.f32.mrf.mxu0
    %v1044 = vadd.f32 %v859, %v1043
    %v1045 = vpop.f32.mrf.mxu0
    %v1046 = vadd.f32 %v861, %v1045
    %1047 = vdwg.mxu0
    %1048 = vmatprep.subr.mxu0 %v536
    %1049 = vmatpush1.msra.mxu0 %v535
    %1050 = vmatprep.subr.mxu0 %v534
    %1051 = vmatpush1.msra.mxu0 %v533
    %1052 = vmatprep.subr.mxu0 %v532
    %1053 = vmatpush1.msra.mxu0 %v531
    %1054 = vmatprep.subr.mxu0 %v530
    %1055 = vmatpush1.msra.mxu0 %v529
    %1056 = vmatprep.subr.mxu0 %v528
    %1057 = vmatpush1.msra.mxu0 %v527
    %1058 = vmatprep.subr.mxu0 %v526
    %1059 = vmatpush1.msra.mxu0 %v525
    %1060 = vmatprep.subr.mxu0 %v524
    %1061 = vmatpush1.msra.mxu0 %v523
    %1062 = vmatprep.subr.mxu0 %v522
    %1063 = vmatpush1.msra.mxu0 %v521
    %1064 = vmatprep.subr.mxu0 %v520
    %1065 = vmatpush1.msra.mxu0 %v519
    %1066 = vmatprep.subr.mxu0 %v518
    %1067 = vmatpush1.msra.mxu0 %v517
    %1068 = vmatprep.subr.mxu0 %v516
    %1069 = vmatpush1.msra.mxu0 %v515
    %1070 = vmatprep.subr.mxu0 %v514
    %1071 = vmatpush1.msra.mxu0 %v513
    %1072 = vmatprep.subr.mxu0 %v512
    %1073 = vmatpush1.msra.mxu0 %v511
    %1074 = vmatprep.subr.mxu0 %v510
    %1075 = vmatpush1.msra.mxu0 %v509
    %1076 = vmatprep.subr.mxu0 %v508
    %1077 = vmatpush1.msra.mxu0 %v507
    %1078 = vmatprep.subr.mxu0 %v506
    %1079 = vmatpush1.msra.mxu0 %v505
    %1080 = vmatprep.subr.mxu0 %v568
    %1081 = vmatpush2.msra.mxu0 %v567
    %1082 = vmatprep.subr.mxu0 %v566
    %1083 = vmatpush2.msra.mxu0 %v565
    %1084 = vmatprep.subr.mxu0 %v564
    %1085 = vmatpush2.msra.mxu0 %v563
    %1086 = vmatprep.subr.mxu0 %v562
    %1087 = vmatpush2.msra.mxu0 %v561
    %1088 = vmatprep.subr.mxu0 %v560
    %1089 = vmatpush2.msra.mxu0 %v559
    %1090 = vmatprep.subr.mxu0 %v558
    %1091 = vmatpush2.msra.mxu0 %v557
    %1092 = vmatprep.subr.mxu0 %v556
    %1093 = vmatpush2.msra.mxu0 %v555
    %1094 = vmatprep.subr.mxu0 %v554
    %1095 = vmatpush2.msra.mxu0 %v553
    %1096 = vmatprep.subr.mxu0 %v552
    %1097 = vmatpush2.msra.mxu0 %v551
    %1098 = vmatprep.subr.mxu0 %v550
    %1099 = vmatpush2.msra.mxu0 %v549
    %1100 = vmatprep.subr.mxu0 %v548
    %1101 = vmatpush2.msra.mxu0 %v547
    %1102 = vmatprep.subr.mxu0 %v546
    %1103 = vmatpush2.msra.mxu0 %v545
    %1104 = vmatprep.subr.mxu0 %v544
    %1105 = vmatpush2.msra.mxu0 %v543
    %1106 = vmatprep.subr.mxu0 %v542
    %1107 = vmatpush2.msra.mxu0 %v541
    %1108 = vmatprep.subr.mxu0 %v540
    %1109 = vmatpush2.msra.mxu0 %v539
    %1110 = vmatprep.subr.mxu0 %v538
    %1111 = vmatpush2.msra.mxu0 %v537
    %1112 = vmatprep.mubr.f32.mxu0 %v222
    %1113 = vmatmul.mubr.f32.gmra.mxu0 %v221
    %v1114 = vpop.f32.mrf.mxu0
    %v1115 = vadd.f32 %v930, %v1114
    %v1116 = vpop.f32.mrf.mxu0
    %v1117 = vadd.f32 %v932, %v1116
    %1118 = vmatprep.mubr.f32.mxu0 %v230
    %1119 = vmatmul.mubr.f32.gmra.mxu0 %v229
    %v1120 = vpop.f32.mrf.mxu0
    %v1121 = vadd.f32 %v936, %v1120
    %v1122 = vpop.f32.mrf.mxu0
    %v1123 = vadd.f32 %v938, %v1122
    %1124 = vmatprep.mubr.f32.mxu0 %v238
    %1125 = vmatmul.mubr.f32.gmra.mxu0 %v237
    %v1126 = vpop.f32.mrf.mxu0
    %v1127 = vadd.f32 %v942, %v1126
    %v1128 = vpop.f32.mrf.mxu0
    %v1129 = vadd.f32 %v944, %v1128
    %1130 = vmatprep.mubr.f32.mxu0 %v246
    %1131 = vmatmul.mubr.f32.gmra.mxu0 %v245
    %v1132 = vpop.f32.mrf.mxu0
    %v1133 = vadd.f32 %v948, %v1132
    %v1134 = vpop.f32.mrf.mxu0
    %v1135 = vadd.f32 %v950, %v1134
    %1136 = vmatprep.mubr.f32.mxu0 %v254
    %1137 = vmatmul.mubr.f32.gmra.mxu0 %v253
    %v1138 = vpop.f32.mrf.mxu0
    %v1139 = vadd.f32 %v954, %v1138
    %v1140 = vpop.f32.mrf.mxu0
    %v1141 = vadd.f32 %v956, %v1140
    %1142 = vmatprep.mubr.f32.mxu0 %v262
    %1143 = vmatmul.mubr.f32.gmra.mxu0 %v261
    %v1144 = vpop.f32.mrf.mxu0
    %v1145 = vadd.f32 %v960, %v1144
    %v1146 = vpop.f32.mrf.mxu0
    %v1147 = vadd.f32 %v962, %v1146
    %1148 = vmatprep.mubr.f32.mxu0 %v270
    %1149 = vmatmul.mubr.f32.gmra.mxu0 %v269
    %v1150 = vpop.f32.mrf.mxu0
    %v1151 = vadd.f32 %v966, %v1150
    %v1152 = vpop.f32.mrf.mxu0
    %v1153 = vadd.f32 %v968, %v1152
    %1154 = vmatprep.mubr.f32.mxu0 %v278
    %1155 = vmatmul.mubr.f32.gmra.mxu0 %v277
    %v1156 = vpop.f32.mrf.mxu0
    %v1157 = vadd.f32 %v972, %v1156
    %v1158 = vpop.f32.mrf.mxu0
    %v1159 = vadd.f32 %v974, %v1158
    %1160 = vmatprep.mubr.f32.mxu0 %v286
    %1161 = vmatmul.mubr.f32.gmra.mxu0 %v285
    %v1162 = vpop.f32.mrf.mxu0
    %v1163 = vadd.f32 %v978, %v1162
    %v1164 = vpop.f32.mrf.mxu0
    %v1165 = vadd.f32 %v980, %v1164
    %1166 = vmatprep.mubr.f32.mxu0 %v294
    %1167 = vmatmul.mubr.f32.gmra.mxu0 %v293
    %v1168 = vpop.f32.mrf.mxu0
    %v1169 = vadd.f32 %v984, %v1168
    %v1170 = vpop.f32.mrf.mxu0
    %v1171 = vadd.f32 %v986, %v1170
    %1172 = vmatprep.mubr.f32.mxu0 %v302
    %1173 = vmatmul.mubr.f32.gmra.mxu0 %v301
    %v1174 = vpop.f32.mrf.mxu0
    %v1175 = vadd.f32 %v990, %v1174
    %v1176 = vpop.f32.mrf.mxu0
    %v1177 = vadd.f32 %v992, %v1176
    %1178 = vmatprep.mubr.f32.mxu0 %v310
    %1179 = vmatmul.mubr.f32.gmra.mxu0 %v309
    %v1180 = vpop.f32.mrf.mxu0
    %v1181 = vadd.f32 %v996, %v1180
    %v1182 = vpop.f32.mrf.mxu0
    %v1183 = vadd.f32 %v998, %v1182
    %1184 = vmatprep.mubr.f32.mxu0 %v318
    %1185 = vmatmul.mubr.f32.gmra.mxu0 %v317
    %v1186 = vpop.f32.mrf.mxu0
    %v1187 = vadd.f32 %v1002, %v1186
    %v1188 = vpop.f32.mrf.mxu0
    %v1189 = vadd.f32 %v1004, %v1188
    %1190 = vmatprep.mubr.f32.mxu0 %v326
    %1191 = vmatmul.mubr.f32.gmra.mxu0 %v325
    %v1192 = vpop.f32.mrf.mxu0
    %v1193 = vadd.f32 %v1008, %v1192
    %v1194 = vpop.f32.mrf.mxu0
    %v1195 = vadd.f32 %v1010, %v1194
    %1196 = vmatprep.mubr.f32.mxu0 %v334
    %1197 = vmatmul.mubr.f32.gmra.mxu0 %v333
    %v1198 = vpop.f32.mrf.mxu0
    %v1199 = vadd.f32 %v1014, %v1198
    %v1200 = vpop.f32.mrf.mxu0
    %v1201 = vadd.f32 %v1016, %v1200
    %1202 = vmatprep.mubr.f32.mxu0 %v342
    %1203 = vmatmul.mubr.f32.gmra.mxu0 %v341
    %v1204 = vpop.f32.mrf.mxu0
    %v1205 = vadd.f32 %v1020, %v1204
    %v1206 = vpop.f32.mrf.mxu0
    %v1207 = vadd.f32 %v1022, %v1206
    %1208 = vmatprep.mubr.f32.mxu0 %v350
    %1209 = vmatmul.mubr.f32.gmra.mxu0 %v349
    %v1210 = vpop.f32.mrf.mxu0
    %v1211 = vadd.f32 %v1026, %v1210
    %v1212 = vpop.f32.mrf.mxu0
    %v1213 = vadd.f32 %v1028, %v1212
    %1214 = vmatprep.mubr.f32.mxu0 %v358
    %1215 = vmatmul.mubr.f32.gmra.mxu0 %v357
    %v1216 = vpop.f32.mrf.mxu0
    %v1217 = vadd.f32 %v1032, %v1216
    %v1218 = vpop.f32.mrf.mxu0
    %v1219 = vadd.f32 %v1034, %v1218
    %1220 = vmatprep.mubr.f32.mxu0 %v366
    %1221 = vmatmul.mubr.f32.gmra.mxu0 %v365
    %v1222 = vpop.f32.mrf.mxu0
    %v1223 = vadd.f32 %v1038, %v1222
    %v1224 = vpop.f32.mrf.mxu0
    %v1225 = vadd.f32 %v1040, %v1224
    %1226 = vmatprep.mubr.f32.mxu0 %v374
    %1227 = vmatmul.mubr.f32.gmra.mxu0 %v373
    %v1228 = vpop.f32.mrf.mxu0
    %v1229 = vadd.f32 %v1044, %v1228
    %v1230 = vpop.f32.mrf.mxu0
    %v1231 = vadd.f32 %v1046, %v1230
    %1232 = vdwg.mxu0
    %1233 = vmatprep.subr.mxu0 %v600
    %1234 = vmatpush1.msra.mxu0 %v599
    %1235 = vmatprep.subr.mxu0 %v598
    %1236 = vmatpush1.msra.mxu0 %v597
    %1237 = vmatprep.subr.mxu0 %v596
    %1238 = vmatpush1.msra.mxu0 %v595
    %1239 = vmatprep.subr.mxu0 %v594
    %1240 = vmatpush1.msra.mxu0 %v593
    %1241 = vmatprep.subr.mxu0 %v592
    %1242 = vmatpush1.msra.mxu0 %v591
    %1243 = vmatprep.subr.mxu0 %v590
    %1244 = vmatpush1.msra.mxu0 %v589
    %1245 = vmatprep.subr.mxu0 %v588
    %1246 = vmatpush1.msra.mxu0 %v587
    %1247 = vmatprep.subr.mxu0 %v586
    %1248 = vmatpush1.msra.mxu0 %v585
    %1249 = vmatprep.subr.mxu0 %v584
    %1250 = vmatpush1.msra.mxu0 %v583
    %1251 = vmatprep.subr.mxu0 %v582
    %1252 = vmatpush1.msra.mxu0 %v581
    %1253 = vmatprep.subr.mxu0 %v580
    %1254 = vmatpush1.msra.mxu0 %v579
    %1255 = vmatprep.subr.mxu0 %v578
    %1256 = vmatpush1.msra.mxu0 %v577
    %1257 = vmatprep.subr.mxu0 %v576
    %1258 = vmatpush1.msra.mxu0 %v575
    %1259 = vmatprep.subr.mxu0 %v574
    %1260 = vmatpush1.msra.mxu0 %v573
    %1261 = vmatprep.subr.mxu0 %v572
    %1262 = vmatpush1.msra.mxu0 %v571
    %1263 = vmatprep.subr.mxu0 %v570
    %1264 = vmatpush1.msra.mxu0 %v569
    %1265 = vmatprep.subr.mxu0 0.0
    %1266 = vmatpush2.msra.mxu0 0.0
    %1267 = vmatprep.subr.mxu0 0.0
    %1268 = vmatpush2.msra.mxu0 0.0
    %1269 = vmatprep.subr.mxu0 0.0
    %1270 = vmatpush2.msra.mxu0 0.0
    %1271 = vmatprep.subr.mxu0 0.0
    %1272 = vmatpush2.msra.mxu0 0.0
    %1273 = vmatprep.subr.mxu0 0.0
    %1274 = vmatpush2.msra.mxu0 0.0
    %1275 = vmatprep.subr.mxu0 0.0
    %1276 = vmatpush2.msra.mxu0 0.0
    %1277 = vmatprep.subr.mxu0 0.0
    %1278 = vmatpush2.msra.mxu0 0.0
    %1279 = vmatprep.subr.mxu0 0.0
    %1280 = vmatpush2.msra.mxu0 0.0
    %1281 = vmatprep.subr.mxu0 %v616
    %1282 = vmatpush2.msra.mxu0 %v615
    %1283 = vmatprep.subr.mxu0 %v614
    %1284 = vmatpush2.msra.mxu0 %v613
    %1285 = vmatprep.subr.mxu0 %v612
    %1286 = vmatpush2.msra.mxu0 %v611
    %1287 = vmatprep.subr.mxu0 %v610
    %1288 = vmatpush2.msra.mxu0 %v609
    %1289 = vmatprep.subr.mxu0 %v608
    %1290 = vmatpush2.msra.mxu0 %v607
    %1291 = vmatprep.subr.mxu0 %v606
    %1292 = vmatpush2.msra.mxu0 %v605
    %1293 = vmatprep.subr.mxu0 %v604
    %1294 = vmatpush2.msra.mxu0 %v603
    %1295 = vmatprep.subr.mxu0 %v602
    %1296 = vmatpush2.msra.mxu0 %v601
    %1297 = vmatprep.mubr.f32.mxu0 %v619
    %1298 = vmatmul.mubr.f32.gmra.mxu0 %v223
    %v1299 = vpop.f32.mrf.mxu0
    %v1300 = vadd.f32 %v1115, %v1299
    %v1301 = vpop.f32.mrf.mxu0
    %v1302 = vadd.f32 %v1117, %v1301
    %1303 = vmatprep.mubr.f32.mxu0 %v622
    %1304 = vmatmul.mubr.f32.gmra.mxu0 %v231
    %v1305 = vpop.f32.mrf.mxu0
    %v1306 = vadd.f32 %v1121, %v1305
    %v1307 = vpop.f32.mrf.mxu0
    %v1308 = vadd.f32 %v1123, %v1307
    %1309 = vmatprep.mubr.f32.mxu0 %v625
    %1310 = vmatmul.mubr.f32.gmra.mxu0 %v239
    %v1311 = vpop.f32.mrf.mxu0
    %v1312 = vadd.f32 %v1127, %v1311
    %v1313 = vpop.f32.mrf.mxu0
    %v1314 = vadd.f32 %v1129, %v1313
    %1315 = vmatprep.mubr.f32.mxu0 %v628
    %1316 = vmatmul.mubr.f32.gmra.mxu0 %v247
    %v1317 = vpop.f32.mrf.mxu0
    %v1318 = vadd.f32 %v1133, %v1317
    %v1319 = vpop.f32.mrf.mxu0
    %v1320 = vadd.f32 %v1135, %v1319
    %1321 = vmatprep.mubr.f32.mxu0 %v631
    %1322 = vmatmul.mubr.f32.gmra.mxu0 %v255
    %v1323 = vpop.f32.mrf.mxu0
    %v1324 = vadd.f32 %v1139, %v1323
    %v1325 = vpop.f32.mrf.mxu0
    %v1326 = vadd.f32 %v1141, %v1325
    %1327 = vmatprep.mubr.f32.mxu0 %v634
    %1328 = vmatmul.mubr.f32.gmra.mxu0 %v263
    %v1329 = vpop.f32.mrf.mxu0
    %v1330 = vadd.f32 %v1145, %v1329
    %v1331 = vpop.f32.mrf.mxu0
    %v1332 = vadd.f32 %v1147, %v1331
    %1333 = vmatprep.mubr.f32.mxu0 %v637
    %1334 = vmatmul.mubr.f32.gmra.mxu0 %v271
    %v1335 = vpop.f32.mrf.mxu0
    %v1336 = vadd.f32 %v1151, %v1335
    %v1337 = vpop.f32.mrf.mxu0
    %v1338 = vadd.f32 %v1153, %v1337
    %1339 = vmatprep.mubr.f32.mxu0 %v640
    %1340 = vmatmul.mubr.f32.gmra.mxu0 %v279
    %v1341 = vpop.f32.mrf.mxu0
    %v1342 = vadd.f32 %v1157, %v1341
    %v1343 = vpop.f32.mrf.mxu0
    %v1344 = vadd.f32 %v1159, %v1343
    %1345 = vmatprep.mubr.f32.mxu0 %v643
    %1346 = vmatmul.mubr.f32.gmra.mxu0 %v287
    %v1347 = vpop.f32.mrf.mxu0
    %v1348 = vadd.f32 %v1163, %v1347
    %v1349 = vpop.f32.mrf.mxu0
    %v1350 = vadd.f32 %v1165, %v1349
    %1351 = vmatprep.mubr.f32.mxu0 %v646
    %1352 = vmatmul.mubr.f32.gmra.mxu0 %v295
    %v1353 = vpop.f32.mrf.mxu0
    %v1354 = vadd.f32 %v1169, %v1353
    %v1355 = vpop.f32.mrf.mxu0
    %v1356 = vadd.f32 %v1171, %v1355
    %1357 = vmatprep.mubr.f32.mxu0 %v649
    %1358 = vmatmul.mubr.f32.gmra.mxu0 %v303
    %v1359 = vpop.f32.mrf.mxu0
    %v1360 = vadd.f32 %v1175, %v1359
    %v1361 = vpop.f32.mrf.mxu0
    %v1362 = vadd.f32 %v1177, %v1361
    %1363 = vmatprep.mubr.f32.mxu0 %v652
    %1364 = vmatmul.mubr.f32.gmra.mxu0 %v311
    %v1365 = vpop.f32.mrf.mxu0
    %v1366 = vadd.f32 %v1181, %v1365
    %v1367 = vpop.f32.mrf.mxu0
    %v1368 = vadd.f32 %v1183, %v1367
    %1369 = vmatprep.mubr.f32.mxu0 %v655
    %1370 = vmatmul.mubr.f32.gmra.mxu0 %v319
    %v1371 = vpop.f32.mrf.mxu0
    %v1372 = vadd.f32 %v1187, %v1371
    %v1373 = vpop.f32.mrf.mxu0
    %v1374 = vadd.f32 %v1189, %v1373
    %1375 = vmatprep.mubr.f32.mxu0 %v658
    %1376 = vmatmul.mubr.f32.gmra.mxu0 %v327
    %v1377 = vpop.f32.mrf.mxu0
    %v1378 = vadd.f32 %v1193, %v1377
    %v1379 = vpop.f32.mrf.mxu0
    %v1380 = vadd.f32 %v1195, %v1379
    %1381 = vmatprep.mubr.f32.mxu0 %v661
    %1382 = vmatmul.mubr.f32.gmra.mxu0 %v335
    %v1383 = vpop.f32.mrf.mxu0
    %v1384 = vadd.f32 %v1199, %v1383
    %v1385 = vpop.f32.mrf.mxu0
    %v1386 = vadd.f32 %v1201, %v1385
    %1387 = vmatprep.mubr.f32.mxu0 %v664
    %1388 = vmatmul.mubr.f32.gmra.mxu0 %v343
    %v1389 = vpop.f32.mrf.mxu0
    %v1390 = vadd.f32 %v1205, %v1389
    %v1391 = vpop.f32.mrf.mxu0
    %v1392 = vadd.f32 %v1207, %v1391
    %1393 = vmatprep.mubr.f32.mxu0 %v667
    %1394 = vmatmul.mubr.f32.gmra.mxu0 %v351
    %v1395 = vpop.f32.mrf.mxu0
    %v1396 = vadd.f32 %v1211, %v1395
    %v1397 = vpop.f32.mrf.mxu0
    %v1398 = vadd.f32 %v1213, %v1397
    %1399 = vmatprep.mubr.f32.mxu0 %v670
    %1400 = vmatmul.mubr.f32.gmra.mxu0 %v359
    %v1401 = vpop.f32.mrf.mxu0
    %v1402 = vadd.f32 %v1217, %v1401
    %v1403 = vpop.f32.mrf.mxu0
    %v1404 = vadd.f32 %v1219, %v1403
    %1405 = vmatprep.mubr.f32.mxu0 %v673
    %1406 = vmatmul.mubr.f32.gmra.mxu0 %v367
    %v1407 = vpop.f32.mrf.mxu0
    %v1408 = vadd.f32 %v1223, %v1407
    %v1409 = vpop.f32.mrf.mxu0
    %v1410 = vadd.f32 %v1225, %v1409
    %1411 = vmatprep.mubr.f32.mxu0 %v676
    %1412 = vmatmul.mubr.f32.gmra.mxu0 %v375
    %v1413 = vpop.f32.mrf.mxu0
    %v1414 = vadd.f32 %v1229, %v1413
    %v1415 = vpop.f32.mrf.mxu0
    %v1416 = vadd.f32 %v1231, %v1415
    %1417 = vdwg.mxu0
    %1418 = vst [vmem:[#allocation2] sm:$0xff] %v1300
    %vm1419 = vcmask 556032
    %1420 = vst.msk [vmem:[#allocation2 + $0x8] sm:$0xff] %vm1419, %v1302
    %1421 = vst [vmem:[#allocation2 + $0x10] sm:$0xff] %v1306
    %1422 = vst.msk [vmem:[#allocation2 + $0x18] sm:$0xff] %vm1419, %v1308
    %1423 = vst [vmem:[#allocation2 + $0x20] sm:$0xff] %v1312
    %1424 = vst.msk [vmem:[#allocation2 + $0x28] sm:$0xff] %vm1419, %v1314
    %1425 = vst [vmem:[#allocation2 + $0x30] sm:$0xff] %v1318
    %1426 = vst.msk [vmem:[#allocation2 + $0x38] sm:$0xff] %vm1419, %v1320
    %1427 = vst [vmem:[#allocation2 + $0x40] sm:$0xff] %v1324
    %1428 = vst.msk [vmem:[#allocation2 + $0x48] sm:$0xff] %vm1419, %v1326
    %1429 = vst [vmem:[#allocation2 + $0x50] sm:$0xff] %v1330
    %1430 = vst.msk [vmem:[#allocation2 + $0x58] sm:$0xff] %vm1419, %v1332
    %1431 = vst [vmem:[#allocation2 + $0x60] sm:$0xff] %v1336
    %1432 = vst.msk [vmem:[#allocation2 + $0x68] sm:$0xff] %vm1419, %v1338
    %1433 = vst [vmem:[#allocation2 + $0x70] sm:$0xff] %v1342
    %1434 = vst.msk [vmem:[#allocation2 + $0x78] sm:$0xff] %vm1419, %v1344
    %1435 = vst [vmem:[#allocation2 + $0x80] sm:$0xff] %v1348
    %1436 = vst.msk [vmem:[#allocation2 + $0x88] sm:$0xff] %vm1419, %v1350
    %1437 = vst [vmem:[#allocation2 + $0x90] sm:$0xff] %v1354
    %1438 = vst.msk [vmem:[#allocation2 + $0x98] sm:$0xff] %vm1419, %v1356
    %1439 = vst [vmem:[#allocation2 + $0xa0] sm:$0xff] %v1360
    %1440 = vst.msk [vmem:[#allocation2 + $0xa8] sm:$0xff] %vm1419, %v1362
    %1441 = vst [vmem:[#allocation2 + $0xb0] sm:$0xff] %v1366
    %1442 = vst.msk [vmem:[#allocation2 + $0xb8] sm:$0xff] %vm1419, %v1368
    %1443 = vst [vmem:[#allocation2 + $0xc0] sm:$0xff] %v1372
    %1444 = vst.msk [vmem:[#allocation2 + $0xc8] sm:$0xff] %vm1419, %v1374
    %1445 = vst [vmem:[#allocation2 + $0xd0] sm:$0xff] %v1378
    %1446 = vst.msk [vmem:[#allocation2 + $0xd8] sm:$0xff] %vm1419, %v1380
    %1447 = vst [vmem:[#allocation2 + $0xe0] sm:$0xff] %v1384
    %1448 = vst.msk [vmem:[#allocation2 + $0xe8] sm:$0xff] %vm1419, %v1386
    %1449 = vst [vmem:[#allocation2 + $0xf0] sm:$0xff] %v1390
    %1450 = vst.msk [vmem:[#allocation2 + $0xf8] sm:$0xff] %vm1419, %v1392
    %1451 = vst [vmem:[#allocation2 + $0x100] sm:$0xff] %v1396
    %1452 = vst.msk [vmem:[#allocation2 + $0x108] sm:$0xff] %vm1419, %v1398
    %1453 = vst [vmem:[#allocation2 + $0x110] sm:$0xff] %v1402
    %1454 = vst.msk [vmem:[#allocation2 + $0x118] sm:$0xff] %vm1419, %v1404
    %1455 = vst [vmem:[#allocation2 + $0x120] sm:$0xff] %v1408
    %1456 = vst.msk [vmem:[#allocation2 + $0x128] sm:$0xff] %vm1419, %v1410
    %1457 = vst [vmem:[#allocation2 + $0x130] sm:$0xff] %v1414
    %1458 = vst.msk [vmem:[#allocation2 + $0x138] sm:$0xff] %vm1419, %v1416
    // Predicated region
    $region14: #{tpu_custom_call.1} parent=1 // pred_check
      _
    $region15: #{tpu_custom_call.1} parent=1 // pred_check_branch
      %1460 = sbr.rel (0) target = $region17
    $region16: #{tpu_custom_call.1} parent=1 // pred_region
      %s1462 = ssub.s32 5120, 5120
      %1463 = vsyncadd [#allocation3], %s1462
      %s1464 = sshll.u32 [#allocation2], 4
      %s1465 = int_to_ptr.vmem [resolvable:$true] %s1464
      %1470 = dma.vmem_to_hbm [thread:$0]  %s1465, 5120, %s3, [#allocation3], 256, 256, 16
    $region17: #{tpu_custom_call.1} parent=1 // pred_fallthru
      _
    // Predicated region
    $region18: #{tpu_custom_call.1} parent=1 // pred_check
      _
    $region19: #{tpu_custom_call.1} parent=1 // pred_check_branch
      %1472 = sbr.rel (0) target = $region21
    $region20: #{tpu_custom_call.1} parent=1 // pred_region
      %1473 = dma.done [#allocation3], 5120
    $region21: #{tpu_custom_call.1} parent=1 // pred_fallthru
      _
    %1474 = vsyncpa [#allocation3], 1

</llo_original>
